<compile_context>
chip_gen: v6e
topology: v6e:2x2x1
jax: 0.10.0
libtpu: 0.0.40
codegen_flags: <defaults>
</compile_context>

<pallas_src>
import math

import jax
import jax.numpy as jnp
from jax.experimental import pallas as pl
from jax.experimental.pallas import tpu as pltpu


MAX_BATCH_BLOCK = 256   # M=256 fills the 256-wide MXUs on v6e/v7x; fine on v5e


# ----------------------------------------------------------------------------
# Pallas kernel
# ----------------------------------------------------------------------------
def rnn_ae_kernel(x_ref,                       # (T*BB, D) bf16, time-major per block
                  wx_ref, bx_ref,              # fused input proj (D, 8H) bf16, (1, 8H) f32
                  weh_ref, wdh_ref,            # recurrent weights (H, 4H)/(D, 4D) bf16
                  wl1_ref, bl1_ref,            # hidden_to_latent (bf16 / f32)
                  wl2_ref, bl2_ref,            # latent_to_hidden (bf16 / f32)
                  out_ref):                    # (BB, T*D) f32, lane-dense
    TB, D = x_ref.shape
    Bb = out_ref.shape[0]
    T = TB // Bb
    H = weh_ref.shape[0]
    G = 4 * H                                  # per-LSTM gate width (D == H)

    # Interleave two independent batch sub-chains on the serial recurrence to
    # hide MXU->EUP->VPU latency; halves must stay sublane (8-row) aligned.
    n_i = 2 if (Bb >= 16 and Bb % 16 == 0) else 1
    Bc = Bb // n_i

    # --- fused input projection for BOTH LSTMs: one big lane-dense matmul ---
    # columns: [ i f o g | i f o g ] (encoder | decoder), biases pre-folded.
    xp = (jnp.dot(x_ref[...], wx_ref[...], preferred_element_type=jnp.float32)
          + bx_ref[...])                       # (T*Bb, 2G) f32

    def step(gates, c):
        # Full-width transcendentals (EUP slot has slack); slice results only
        # for the VPU combines.  Gate order is [i, f, o, g].
        sig = jax.nn.sigmoid(gates)
        tnh = jnp.tanh(gates)
        c = sig[:, H:2 * H] * c + sig[:, :H] * tnh[:, 3 * H:]
        h = sig[:, 2 * H:3 * H] * jnp.tanh(c)
        return h, c

    # ----- encoder recurrence (fully unrolled, T static): keep final h -----
    weh = weh_ref[...]
    hE = [jnp.zeros((Bc, H), jnp.float32) for _ in range(n_i)]
    cE = [jnp.zeros((Bc, H), jnp.float32) for _ in range(n_i)]
    for t in range(T):
        g = [xp[t * Bb + k * Bc:t * Bb + (k + 1) * Bc, :G]
             + jnp.dot(hE[k].astype(jnp.bfloat16), weh,
                       preferred_element_type=jnp.float32)
             for k in range(n_i)]
        for k in range(n_i):
            hE[k], cE[k] = step(g[k], cE[k])

    # ----- bottleneck: h_enc -> latent -> decoder initial hidden -----
    wl1 = wl1_ref[...]
    wl2 = wl2_ref[...]
    hD, cD = [], []
    for k in range(n_i):
        lat = (jnp.dot(hE[k].astype(jnp.bfloat16), wl1,
                       preferred_element_type=jnp.float32) + bl1_ref[...])
        h0 = (jnp.dot(lat.astype(jnp.bfloat16), wl2,
                      preferred_element_type=jnp.float32) + bl2_ref[...])
        hD.append(h0)
        cD.append(jnp.zeros((Bc, H), jnp.float32))

    # ----- decoder recurrence: stream every h_t straight into out_ref -----
    wdh = wdh_ref[...]
    prev = [None] * n_i
    for t in range(T):
        g = [xp[t * Bb + k * Bc:t * Bb + (k + 1) * Bc, G:]
             + jnp.dot(hD[k].astype(jnp.bfloat16), wdh,
                       preferred_element_type=jnp.float32)
             for k in range(n_i)]
        for k in range(n_i):
            hD[k], cD[k] = step(g[k], cD[k])
            if t % 2 == 1:
                # pack two timesteps -> one 128-lane-dense unmasked store
                out_ref[k * Bc:(k + 1) * Bc, (t - 1) * D:(t + 1) * D] = (
                    jnp.concatenate([prev[k], hD[k]], axis=1))
            elif t == T - 1:           # odd T: trailing single-step write
                out_ref[k * Bc:(k + 1) * Bc, t * D:(t + 1) * D] = hD[k]
            else:
                prev[k] = hD[k]


# ----------------------------------------------------------------------------
# One-time parameter preparation (gate reorder, transpose, bias fold, bf16,
# encoder/decoder input-projection fusion)
# ----------------------------------------------------------------------------
def _reorder_gates(a):
    """PyTorch packs LSTM gate rows as [i, f, g, o]; permute to [i, f, o, g]."""
    i, f, g, o = jnp.split(a, 4, axis=0)
    return jnp.concatenate([i, f, o, g], axis=0)


def prepare_params(p):
    def lstm_in(w_ih, b_ih, b_hh):
        wx = _reorder_gates(w_ih).T.astype(jnp.bfloat16)       # (in, 4*hid)
        b = _reorder_gates(b_ih + b_hh)[None, :]                # (1, 4*hid) f32
        return wx, b

    we_x, be = lstm_in(p["w_ih_e"], p["b_ih_e"], p["b_hh_e"])
    wd_x, bd = lstm_in(p["w_ih_d"], p["b_ih_d"], p["b_hh_d"])
    assert we_x.shape[0] == wd_x.shape[0], "requires input_dim == hidden_dim"

    return dict(
        # fused encoder+decoder input projection: (D, 8H) bf16 + (1, 8H) f32
        wx=jnp.concatenate([we_x, wd_x], axis=1),
        bx=jnp.concatenate([be, bd], axis=1).astype(jnp.float32),
        we_h=_reorder_gates(p["w_hh_e"]).T.astype(jnp.bfloat16),
        wd_h=_reorder_gates(p["w_hh_d"]).T.astype(jnp.bfloat16),
        wl1=p["w_l1"].T.astype(jnp.bfloat16), bl1=p["b_l1"][None, :],
        wl2=p["w_l2"].T.astype(jnp.bfloat16), bl2=p["b_l2"][None, :],
    )


# ----------------------------------------------------------------------------
# Forward wrapper
# ----------------------------------------------------------------------------
def _round_up(a, m):
    return -(-a // m) * m


def _choose_block(B):
    """Batch block: as large as possible (MXU fill, grid-overhead amortization)
    but >= 2 grid blocks for non-tiny batches (v7x has 2 TensorCores), capped
    at 256, and a multiple of 16 so the in-kernel interleave halves stay
    sublane aligned."""
    b8 = _round_up(B, 8)
    if b8 <= 16:
        return b8
    return max(16, min(MAX_BATCH_BLOCK, _round_up(-(-b8 // 2), 16)))


@jax.jit
def rnn_autoencoder_forward(x, prep):
    """x: (B, T, D) float32, batch-first like the PyTorch module."""
    B, T, D = x.shape
    H = prep["we_h"].shape[0]
    assert D == H, "module only well-defined when input_dim == hidden_dim"

    BB = _choose_block(B)
    B_pad = _round_up(B, BB)
    nb = B_pad // BB

    xp = x if B_pad == B else jnp.pad(x, ((0, B_pad - B), (0, 0), (0, 0)))
    # Per batch block: time-major, flattened to a 2-D (T*BB, D) slab and cast
    # to bf16 once in XLA (x only ever feeds the MXU).
    x_blk = (xp.reshape(nb, BB, T, D)
               .transpose(0, 2, 1, 3)
               .reshape(nb, T * BB, D)
               .astype(jnp.bfloat16))

    weights = (prep["wx"], prep["bx"], prep["we_h"], prep["wd_h"],
               prep["wl1"], prep["bl1"], prep["wl2"], prep["bl2"])

    def full(a):   # whole (small) weight tensor resident every grid step
        return pl.BlockSpec(a.shape, lambda b: (0,) * a.ndim)

    y = pl.pallas_call(
        rnn_ae_kernel,
        out_shape=jax.ShapeDtypeStruct((B_pad, T * D), jnp.float32),
        grid=(nb,),
        in_specs=[pl.BlockSpec((None, T * BB, D), lambda b: (b, 0, 0))]
                 + [full(a) for a in weights],
        out_specs=pl.BlockSpec((BB, T * D), lambda b: (b, 0)),
        compiler_params=pltpu.CompilerParams(
            dimension_semantics=("parallel",),
            vmem_limit_bytes=32 * 1024 * 1024),
    )(x_blk, *weights)

    return y[:B].reshape(B, T, D)


# ----------------------------------------------------------------------------
# Deterministic parameter init (PyTorch-style U(-1/sqrt(h), 1/sqrt(h)))
# ----------------------------------------------------------------------------
def init_params(key, input_dim, hidden_dim, latent_dim):
    ks = jax.random.split(key, 12)

    def u(k, shape, fan):
        bound = 1.0 / math.sqrt(fan)
        return jax.random.uniform(k, shape, jnp.float32, -bound, bound)

    D, H, L = input_dim, hidden_dim, latent_dim
    return {
        # encoder LSTM (input D -> hidden H)
        "w_ih_e": u(ks[0], (4 * H, D), H), "w_hh_e": u(ks[1], (4 * H, H), H),
        "b_ih_e": u(ks[2], (4 * H,), H),   "b_hh_e": u(ks[3], (4 * H,), H),
        # hidden_to_latent (H -> L), latent_to_hidden (L -> H)
        "w_l1": u(ks[4], (L, H), H), "b_l1": u(ks[5], (L,), H),
        "w_l2": u(ks[6], (H, L), L), "b_l2": u(ks[7], (H,), L),
        # decoder LSTM (input H -> hidden D)
        "w_ih_d": u(ks[8], (4 * D, H), D), "w_hh_d": u(ks[9], (4 * D, D), D),
        "b_ih_d": u(ks[10], (4 * D,), D),  "b_hh_d": u(ks[11], (4 * D,), D),
    }


# ----------------------------------------------------------------------------
# Pure-JAX reference (mirrors the PyTorch forward, original gate order, f32)
# ----------------------------------------------------------------------------
def reference_forward(x, p):
    def cell(x_t, h, c, w_ih, w_hh, b_ih, b_hh):
        gates = x_t @ w_ih.T + b_ih + h @ w_hh.T + b_hh
        i, f, g, o = jnp.split(gates, 4, axis=-1)
        c = jax.nn.sigmoid(f) * c + jax.nn.sigmoid(i) * jnp.tanh(g)
        h = jax.nn.sigmoid(o) * jnp.tanh(c)
        return h, c

    B, T, D = x.shape
    H = p["w_hh_e"].shape[1]
    h = jnp.zeros((B, H)); c = jnp.zeros((B, H))
    for t in range(T):
        h, c = cell(x[:, t], h, c, p["w_ih_e"], p["w_hh_e"], p["b_ih_e"], p["b_hh_e"])
    latent = h @ p["w_l1"].T + p["b_l1"]
    h_d = latent @ p["w_l2"].T + p["b_l2"]
    c_d = jnp.zeros_like(h_d)
    outs = []
    for t in range(T):
        h_d, c_d = cell(x[:, t], h_d, c_d, p["w_ih_d"], p["w_hh_d"], p["b_ih_d"], p["b_hh_d"])
        outs.append(h_d)
    return jnp.stack(outs, axis=1)


if __name__ == "__main__":
    input_dim = 64     # must equal hidden_dim for the original module to run
    hidden_dim = 64
    latent_dim = 32
    T = 8

    key = jax.random.PRNGKey(0)
    kx, kx2, kp = jax.random.split(key, 3)
    params = init_params(kp, input_dim, hidden_dim, latent_dim)
    prep = prepare_params(params)

    # small batch (single block, no interleave)
    x = jax.random.normal(kx, (2, T, input_dim), jnp.float32)
    out = jax.block_until_ready(rnn_autoencoder_forward(x, prep))
    assert out.shape == (2, T, input_dim)
    ref = reference_forward(x, params)
    # bf16 MXU operands (f32 accumulation) -> looser tolerance than pure f32.
    assert jnp.allclose(out, ref, atol=4e-2, rtol=4e-2), "mismatch vs reference (B=2)"

    # moderate batch: exercises multi-block grid + two interleaved sub-chains
    x2 = jax.random.normal(kx2, (40, T, input_dim), jnp.float32)
    out2 = jax.block_until_ready(rnn_autoencoder_forward(x2, prep))
    assert out2.shape == (40, T, input_dim)
    ref2 = reference_forward(x2, params)
    assert jnp.allclose(out2, ref2, atol=4e-2, rtol=4e-2), "mismatch vs reference (B=40)"

    print("KERNEL_OK")
</pallas_src>

<mosaic_0001>
module attributes {stable_mosaic.version = 11 : i64} {
  func.func @rnn_ae_kernel(%arg0: i32, %arg1: memref<1x64x64xbf16, #tpu.memory_space<vmem>>, %arg2: memref<64x512xbf16, #tpu.memory_space<vmem>>, %arg3: memref<1x512xf32, #tpu.memory_space<vmem>>, %arg4: memref<64x256xbf16, #tpu.memory_space<vmem>>, %arg5: memref<64x256xbf16, #tpu.memory_space<vmem>>, %arg6: memref<64x32xbf16, #tpu.memory_space<vmem>>, %arg7: memref<1x32xf32, #tpu.memory_space<vmem>>, %arg8: memref<32x64xbf16, #tpu.memory_space<vmem>>, %arg9: memref<1x64xf32, #tpu.memory_space<vmem>>, %arg10: memref<8x512xf32, #tpu.memory_space<vmem>>) attributes {dimension_semantics = [#tpu.dimension_semantics<parallel>], iteration_bounds = array<i64: 1>, scalar_prefetch = 0 : i64, scratch_operands = 0 : i64, tpu.core_type = #tpu.core_type<tc>, window_params = [{transform_indices = @transform_0, window_bounds = array<i64: 1, 64, 64>}, {pipeline_mode = #tpu.pipeline_mode<synchronous>, transform_indices = @transform_1, window_bounds = array<i64: 64, 512>}, {pipeline_mode = #tpu.pipeline_mode<synchronous>, transform_indices = @transform_2, window_bounds = array<i64: 1, 512>}, {pipeline_mode = #tpu.pipeline_mode<synchronous>, transform_indices = @transform_3, window_bounds = array<i64: 64, 256>}, {pipeline_mode = #tpu.pipeline_mode<synchronous>, transform_indices = @transform_4, window_bounds = array<i64: 64, 256>}, {pipeline_mode = #tpu.pipeline_mode<synchronous>, transform_indices = @transform_5, window_bounds = array<i64: 64, 32>}, {pipeline_mode = #tpu.pipeline_mode<synchronous>, transform_indices = @transform_6, window_bounds = array<i64: 1, 32>}, {pipeline_mode = #tpu.pipeline_mode<synchronous>, transform_indices = @transform_7, window_bounds = array<i64: 32, 64>}, {pipeline_mode = #tpu.pipeline_mode<synchronous>, transform_indices = @transform_8, window_bounds = array<i64: 1, 64>}, {transform_indices = @transform_9, window_bounds = array<i64: 8, 512>}]} {
    %c0 = arith.constant 0 : index
    %c0_0 = arith.constant 0 : index
    %c0_1 = arith.constant 0 : index
    %0 = vector.load %arg1[%c0, %c0_0, %c0_1] : memref<1x64x64xbf16, #tpu.memory_space<vmem>>, vector<1x64x64xbf16>
    %1 = vector.shape_cast %0 : vector<1x64x64xbf16> to vector<64x64xbf16>
    %c0_2 = arith.constant 0 : index
    %c0_3 = arith.constant 0 : index
    %2 = vector.load %arg2[%c0_2, %c0_3] : memref<64x512xbf16, #tpu.memory_space<vmem>>, vector<64x512xbf16>
    %cst = arith.constant dense<0.000000e+00> : vector<64x512xf32>
    %3 = tpu.matmul %1, %2, %cst {dimension_numbers = #tpu.dot_dimension_numbers<[1], [0], [0], [1], [0, 0, 1, 1], [], []>} : vector<64x64xbf16>, vector<64x512xbf16>, vector<64x512xf32> -> vector<64x512xf32>
    %c0_4 = arith.constant 0 : index
    %c0_5 = arith.constant 0 : index
    %4 = vector.load %arg3[%c0_4, %c0_5] : memref<1x512xf32, #tpu.memory_space<vmem>>, vector<1x512xf32>
    %5 = vector.broadcast %4 : vector<1x512xf32> to vector<64x512xf32>
    %6 = arith.addf %3, %5 : vector<64x512xf32>
    %c0_6 = arith.constant 0 : index
    %c0_7 = arith.constant 0 : index
    %7 = vector.load %arg4[%c0_6, %c0_7] : memref<64x256xbf16, #tpu.memory_space<vmem>>, vector<64x256xbf16>
    %cst_8 = arith.constant 0.000000e+00 : f32
    %8 = vector.broadcast %cst_8 : f32 to vector<8x64xf32>
    %cst_9 = arith.constant 0.000000e+00 : f32
    %9 = vector.broadcast %cst_9 : f32 to vector<8x64xf32>
    %10 = vector.extract_strided_slice %6 {offsets = [0, 0], sizes = [8, 256], strides = [1, 1]} : vector<64x512xf32> to vector<8x256xf32>
    %11 = arith.truncf %8 : vector<8x64xf32> to vector<8x64xbf16>
    %cst_10 = arith.constant dense<0.000000e+00> : vector<8x256xf32>
    %12 = tpu.matmul %11, %7, %cst_10 {dimension_numbers = #tpu.dot_dimension_numbers<[1], [0], [0], [1], [0, 0, 1, 1], [], []>} : vector<8x64xbf16>, vector<64x256xbf16>, vector<8x256xf32> -> vector<8x256xf32>
    %13 = arith.addf %10, %12 : vector<8x256xf32>
    %14 = arith.negf %13 : vector<8x256xf32>
    %15 = math.exp %14 : vector<8x256xf32>
    %cst_11 = arith.constant 1.000000e+00 : f32
    %16 = vector.broadcast %cst_11 : f32 to vector<8x256xf32>
    %17 = arith.addf %16, %15 : vector<8x256xf32>
    %18 = arith.divf %16, %17 : vector<8x256xf32>
    %19 = math.tanh %13 : vector<8x256xf32>
    %20 = vector.extract_strided_slice %18 {offsets = [0, 64], sizes = [8, 64], strides = [1, 1]} : vector<8x256xf32> to vector<8x64xf32>
    %21 = arith.mulf %20, %9 : vector<8x64xf32>
    %22 = vector.extract_strided_slice %18 {offsets = [0, 0], sizes = [8, 64], strides = [1, 1]} : vector<8x256xf32> to vector<8x64xf32>
    %23 = vector.extract_strided_slice %19 {offsets = [0, 192], sizes = [8, 64], strides = [1, 1]} : vector<8x256xf32> to vector<8x64xf32>
    %24 = arith.mulf %22, %23 : vector<8x64xf32>
    %25 = arith.addf %21, %24 : vector<8x64xf32>
    %26 = vector.extract_strided_slice %18 {offsets = [0, 128], sizes = [8, 64], strides = [1, 1]} : vector<8x256xf32> to vector<8x64xf32>
    %27 = math.tanh %25 : vector<8x64xf32>
    %28 = arith.mulf %26, %27 : vector<8x64xf32>
    %29 = vector.extract_strided_slice %6 {offsets = [8, 0], sizes = [8, 256], strides = [1, 1]} : vector<64x512xf32> to vector<8x256xf32>
    %30 = arith.truncf %28 : vector<8x64xf32> to vector<8x64xbf16>
    %cst_12 = arith.constant dense<0.000000e+00> : vector<8x256xf32>
    %31 = tpu.matmul %30, %7, %cst_12 {dimension_numbers = #tpu.dot_dimension_numbers<[1], [0], [0], [1], [0, 0, 1, 1], [], []>} : vector<8x64xbf16>, vector<64x256xbf16>, vector<8x256xf32> -> vector<8x256xf32>
    %32 = arith.addf %29, %31 : vector<8x256xf32>
    %33 = arith.negf %32 : vector<8x256xf32>
    %34 = math.exp %33 : vector<8x256xf32>
    %cst_13 = arith.constant 1.000000e+00 : f32
    %35 = vector.broadcast %cst_13 : f32 to vector<8x256xf32>
    %36 = arith.addf %35, %34 : vector<8x256xf32>
    %37 = arith.divf %35, %36 : vector<8x256xf32>
    %38 = math.tanh %32 : vector<8x256xf32>
    %39 = vector.extract_strided_slice %37 {offsets = [0, 64], sizes = [8, 64], strides = [1, 1]} : vector<8x256xf32> to vector<8x64xf32>
    %40 = arith.mulf %39, %25 : vector<8x64xf32>
    %41 = vector.extract_strided_slice %37 {offsets = [0, 0], sizes = [8, 64], strides = [1, 1]} : vector<8x256xf32> to vector<8x64xf32>
    %42 = vector.extract_strided_slice %38 {offsets = [0, 192], sizes = [8, 64], strides = [1, 1]} : vector<8x256xf32> to vector<8x64xf32>
    %43 = arith.mulf %41, %42 : vector<8x64xf32>
    %44 = arith.addf %40, %43 : vector<8x64xf32>
    %45 = vector.extract_strided_slice %37 {offsets = [0, 128], sizes = [8, 64], strides = [1, 1]} : vector<8x256xf32> to vector<8x64xf32>
    %46 = math.tanh %44 : vector<8x64xf32>
    %47 = arith.mulf %45, %46 : vector<8x64xf32>
    %48 = vector.extract_strided_slice %6 {offsets = [16, 0], sizes = [8, 256], strides = [1, 1]} : vector<64x512xf32> to vector<8x256xf32>
    %49 = arith.truncf %47 : vector<8x64xf32> to vector<8x64xbf16>
    %cst_14 = arith.constant dense<0.000000e+00> : vector<8x256xf32>
    %50 = tpu.matmul %49, %7, %cst_14 {dimension_numbers = #tpu.dot_dimension_numbers<[1], [0], [0], [1], [0, 0, 1, 1], [], []>} : vector<8x64xbf16>, vector<64x256xbf16>, vector<8x256xf32> -> vector<8x256xf32>
    %51 = arith.addf %48, %50 : vector<8x256xf32>
    %52 = arith.negf %51 : vector<8x256xf32>
    %53 = math.exp %52 : vector<8x256xf32>
    %cst_15 = arith.constant 1.000000e+00 : f32
    %54 = vector.broadcast %cst_15 : f32 to vector<8x256xf32>
    %55 = arith.addf %54, %53 : vector<8x256xf32>
    %56 = arith.divf %54, %55 : vector<8x256xf32>
    %57 = math.tanh %51 : vector<8x256xf32>
    %58 = vector.extract_strided_slice %56 {offsets = [0, 64], sizes = [8, 64], strides = [1, 1]} : vector<8x256xf32> to vector<8x64xf32>
    %59 = arith.mulf %58, %44 : vector<8x64xf32>
    %60 = vector.extract_strided_slice %56 {offsets = [0, 0], sizes = [8, 64], strides = [1, 1]} : vector<8x256xf32> to vector<8x64xf32>
    %61 = vector.extract_strided_slice %57 {offsets = [0, 192], sizes = [8, 64], strides = [1, 1]} : vector<8x256xf32> to vector<8x64xf32>
    %62 = arith.mulf %60, %61 : vector<8x64xf32>
    %63 = arith.addf %59, %62 : vector<8x64xf32>
    %64 = vector.extract_strided_slice %56 {offsets = [0, 128], sizes = [8, 64], strides = [1, 1]} : vector<8x256xf32> to vector<8x64xf32>
    %65 = math.tanh %63 : vector<8x64xf32>
    %66 = arith.mulf %64, %65 : vector<8x64xf32>
    %67 = vector.extract_strided_slice %6 {offsets = [24, 0], sizes = [8, 256], strides = [1, 1]} : vector<64x512xf32> to vector<8x256xf32>
    %68 = arith.truncf %66 : vector<8x64xf32> to vector<8x64xbf16>
    %cst_16 = arith.constant dense<0.000000e+00> : vector<8x256xf32>
    %69 = tpu.matmul %68, %7, %cst_16 {dimension_numbers = #tpu.dot_dimension_numbers<[1], [0], [0], [1], [0, 0, 1, 1], [], []>} : vector<8x64xbf16>, vector<64x256xbf16>, vector<8x256xf32> -> vector<8x256xf32>
    %70 = arith.addf %67, %69 : vector<8x256xf32>
    %71 = arith.negf %70 : vector<8x256xf32>
    %72 = math.exp %71 : vector<8x256xf32>
    %cst_17 = arith.constant 1.000000e+00 : f32
    %73 = vector.broadcast %cst_17 : f32 to vector<8x256xf32>
    %74 = arith.addf %73, %72 : vector<8x256xf32>
    %75 = arith.divf %73, %74 : vector<8x256xf32>
    %76 = math.tanh %70 : vector<8x256xf32>
    %77 = vector.extract_strided_slice %75 {offsets = [0, 64], sizes = [8, 64], strides = [1, 1]} : vector<8x256xf32> to vector<8x64xf32>
    %78 = arith.mulf %77, %63 : vector<8x64xf32>
    %79 = vector.extract_strided_slice %75 {offsets = [0, 0], sizes = [8, 64], strides = [1, 1]} : vector<8x256xf32> to vector<8x64xf32>
    %80 = vector.extract_strided_slice %76 {offsets = [0, 192], sizes = [8, 64], strides = [1, 1]} : vector<8x256xf32> to vector<8x64xf32>
    %81 = arith.mulf %79, %80 : vector<8x64xf32>
    %82 = arith.addf %78, %81 : vector<8x64xf32>
    %83 = vector.extract_strided_slice %75 {offsets = [0, 128], sizes = [8, 64], strides = [1, 1]} : vector<8x256xf32> to vector<8x64xf32>
    %84 = math.tanh %82 : vector<8x64xf32>
    %85 = arith.mulf %83, %84 : vector<8x64xf32>
    %86 = vector.extract_strided_slice %6 {offsets = [32, 0], sizes = [8, 256], strides = [1, 1]} : vector<64x512xf32> to vector<8x256xf32>
    %87 = arith.truncf %85 : vector<8x64xf32> to vector<8x64xbf16>
    %cst_18 = arith.constant dense<0.000000e+00> : vector<8x256xf32>
    %88 = tpu.matmul %87, %7, %cst_18 {dimension_numbers = #tpu.dot_dimension_numbers<[1], [0], [0], [1], [0, 0, 1, 1], [], []>} : vector<8x64xbf16>, vector<64x256xbf16>, vector<8x256xf32> -> vector<8x256xf32>
    %89 = arith.addf %86, %88 : vector<8x256xf32>
    %90 = arith.negf %89 : vector<8x256xf32>
    %91 = math.exp %90 : vector<8x256xf32>
    %cst_19 = arith.constant 1.000000e+00 : f32
    %92 = vector.broadcast %cst_19 : f32 to vector<8x256xf32>
    %93 = arith.addf %92, %91 : vector<8x256xf32>
    %94 = arith.divf %92, %93 : vector<8x256xf32>
    %95 = math.tanh %89 : vector<8x256xf32>
    %96 = vector.extract_strided_slice %94 {offsets = [0, 64], sizes = [8, 64], strides = [1, 1]} : vector<8x256xf32> to vector<8x64xf32>
    %97 = arith.mulf %96, %82 : vector<8x64xf32>
    %98 = vector.extract_strided_slice %94 {offsets = [0, 0], sizes = [8, 64], strides = [1, 1]} : vector<8x256xf32> to vector<8x64xf32>
    %99 = vector.extract_strided_slice %95 {offsets = [0, 192], sizes = [8, 64], strides = [1, 1]} : vector<8x256xf32> to vector<8x64xf32>
    %100 = arith.mulf %98, %99 : vector<8x64xf32>
    %101 = arith.addf %97, %100 : vector<8x64xf32>
    %102 = vector.extract_strided_slice %94 {offsets = [0, 128], sizes = [8, 64], strides = [1, 1]} : vector<8x256xf32> to vector<8x64xf32>
    %103 = math.tanh %101 : vector<8x64xf32>
    %104 = arith.mulf %102, %103 : vector<8x64xf32>
    %105 = vector.extract_strided_slice %6 {offsets = [40, 0], sizes = [8, 256], strides = [1, 1]} : vector<64x512xf32> to vector<8x256xf32>
    %106 = arith.truncf %104 : vector<8x64xf32> to vector<8x64xbf16>
    %cst_20 = arith.constant dense<0.000000e+00> : vector<8x256xf32>
    %107 = tpu.matmul %106, %7, %cst_20 {dimension_numbers = #tpu.dot_dimension_numbers<[1], [0], [0], [1], [0, 0, 1, 1], [], []>} : vector<8x64xbf16>, vector<64x256xbf16>, vector<8x256xf32> -> vector<8x256xf32>
    %108 = arith.addf %105, %107 : vector<8x256xf32>
    %109 = arith.negf %108 : vector<8x256xf32>
    %110 = math.exp %109 : vector<8x256xf32>
    %cst_21 = arith.constant 1.000000e+00 : f32
    %111 = vector.broadcast %cst_21 : f32 to vector<8x256xf32>
    %112 = arith.addf %111, %110 : vector<8x256xf32>
    %113 = arith.divf %111, %112 : vector<8x256xf32>
    %114 = math.tanh %108 : vector<8x256xf32>
    %115 = vector.extract_strided_slice %113 {offsets = [0, 64], sizes = [8, 64], strides = [1, 1]} : vector<8x256xf32> to vector<8x64xf32>
    %116 = arith.mulf %115, %101 : vector<8x64xf32>
    %117 = vector.extract_strided_slice %113 {offsets = [0, 0], sizes = [8, 64], strides = [1, 1]} : vector<8x256xf32> to vector<8x64xf32>
    %118 = vector.extract_strided_slice %114 {offsets = [0, 192], sizes = [8, 64], strides = [1, 1]} : vector<8x256xf32> to vector<8x64xf32>
    %119 = arith.mulf %117, %118 : vector<8x64xf32>
    %120 = arith.addf %116, %119 : vector<8x64xf32>
    %121 = vector.extract_strided_slice %113 {offsets = [0, 128], sizes = [8, 64], strides = [1, 1]} : vector<8x256xf32> to vector<8x64xf32>
    %122 = math.tanh %120 : vector<8x64xf32>
    %123 = arith.mulf %121, %122 : vector<8x64xf32>
    %124 = vector.extract_strided_slice %6 {offsets = [48, 0], sizes = [8, 256], strides = [1, 1]} : vector<64x512xf32> to vector<8x256xf32>
    %125 = arith.truncf %123 : vector<8x64xf32> to vector<8x64xbf16>
    %cst_22 = arith.constant dense<0.000000e+00> : vector<8x256xf32>
    %126 = tpu.matmul %125, %7, %cst_22 {dimension_numbers = #tpu.dot_dimension_numbers<[1], [0], [0], [1], [0, 0, 1, 1], [], []>} : vector<8x64xbf16>, vector<64x256xbf16>, vector<8x256xf32> -> vector<8x256xf32>
    %127 = arith.addf %124, %126 : vector<8x256xf32>
    %128 = arith.negf %127 : vector<8x256xf32>
    %129 = math.exp %128 : vector<8x256xf32>
    %cst_23 = arith.constant 1.000000e+00 : f32
    %130 = vector.broadcast %cst_23 : f32 to vector<8x256xf32>
    %131 = arith.addf %130, %129 : vector<8x256xf32>
    %132 = arith.divf %130, %131 : vector<8x256xf32>
    %133 = math.tanh %127 : vector<8x256xf32>
    %134 = vector.extract_strided_slice %132 {offsets = [0, 64], sizes = [8, 64], strides = [1, 1]} : vector<8x256xf32> to vector<8x64xf32>
    %135 = arith.mulf %134, %120 : vector<8x64xf32>
    %136 = vector.extract_strided_slice %132 {offsets = [0, 0], sizes = [8, 64], strides = [1, 1]} : vector<8x256xf32> to vector<8x64xf32>
    %137 = vector.extract_strided_slice %133 {offsets = [0, 192], sizes = [8, 64], strides = [1, 1]} : vector<8x256xf32> to vector<8x64xf32>
    %138 = arith.mulf %136, %137 : vector<8x64xf32>
    %139 = arith.addf %135, %138 : vector<8x64xf32>
    %140 = vector.extract_strided_slice %132 {offsets = [0, 128], sizes = [8, 64], strides = [1, 1]} : vector<8x256xf32> to vector<8x64xf32>
    %141 = math.tanh %139 : vector<8x64xf32>
    %142 = arith.mulf %140, %141 : vector<8x64xf32>
    %143 = vector.extract_strided_slice %6 {offsets = [56, 0], sizes = [8, 256], strides = [1, 1]} : vector<64x512xf32> to vector<8x256xf32>
    %144 = arith.truncf %142 : vector<8x64xf32> to vector<8x64xbf16>
    %cst_24 = arith.constant dense<0.000000e+00> : vector<8x256xf32>
    %145 = tpu.matmul %144, %7, %cst_24 {dimension_numbers = #tpu.dot_dimension_numbers<[1], [0], [0], [1], [0, 0, 1, 1], [], []>} : vector<8x64xbf16>, vector<64x256xbf16>, vector<8x256xf32> -> vector<8x256xf32>
    %146 = arith.addf %143, %145 : vector<8x256xf32>
    %147 = arith.negf %146 : vector<8x256xf32>
    %148 = math.exp %147 : vector<8x256xf32>
    %cst_25 = arith.constant 1.000000e+00 : f32
    %149 = vector.broadcast %cst_25 : f32 to vector<8x256xf32>
    %150 = arith.addf %149, %148 : vector<8x256xf32>
    %151 = arith.divf %149, %150 : vector<8x256xf32>
    %152 = math.tanh %146 : vector<8x256xf32>
    %153 = vector.extract_strided_slice %151 {offsets = [0, 64], sizes = [8, 64], strides = [1, 1]} : vector<8x256xf32> to vector<8x64xf32>
    %154 = arith.mulf %153, %139 : vector<8x64xf32>
    %155 = vector.extract_strided_slice %151 {offsets = [0, 0], sizes = [8, 64], strides = [1, 1]} : vector<8x256xf32> to vector<8x64xf32>
    %156 = vector.extract_strided_slice %152 {offsets = [0, 192], sizes = [8, 64], strides = [1, 1]} : vector<8x256xf32> to vector<8x64xf32>
    %157 = arith.mulf %155, %156 : vector<8x64xf32>
    %158 = arith.addf %154, %157 : vector<8x64xf32>
    %159 = vector.extract_strided_slice %151 {offsets = [0, 128], sizes = [8, 64], strides = [1, 1]} : vector<8x256xf32> to vector<8x64xf32>
    %160 = math.tanh %158 : vector<8x64xf32>
    %161 = arith.mulf %159, %160 : vector<8x64xf32>
    %c0_26 = arith.constant 0 : index
    %c0_27 = arith.constant 0 : index
    %162 = vector.load %arg6[%c0_26, %c0_27] : memref<64x32xbf16, #tpu.memory_space<vmem>>, vector<64x32xbf16>
    %c0_28 = arith.constant 0 : index
    %c0_29 = arith.constant 0 : index
    %163 = vector.load %arg8[%c0_28, %c0_29] : memref<32x64xbf16, #tpu.memory_space<vmem>>, vector<32x64xbf16>
    %164 = arith.truncf %161 : vector<8x64xf32> to vector<8x64xbf16>
    %cst_30 = arith.constant dense<0.000000e+00> : vector<8x32xf32>
    %165 = tpu.matmul %164, %162, %cst_30 {dimension_numbers = #tpu.dot_dimension_numbers<[1], [0], [0], [1], [0, 0, 1, 1], [], []>} : vector<8x64xbf16>, vector<64x32xbf16>, vector<8x32xf32> -> vector<8x32xf32>
    %c0_31 = arith.constant 0 : index
    %c0_32 = arith.constant 0 : index
    %166 = vector.load %arg7[%c0_31, %c0_32] : memref<1x32xf32, #tpu.memory_space<vmem>>, vector<1x32xf32>
    %167 = vector.broadcast %166 : vector<1x32xf32> to vector<8x32xf32>
    %168 = arith.addf %165, %167 : vector<8x32xf32>
    %169 = arith.truncf %168 : vector<8x32xf32> to vector<8x32xbf16>
    %cst_33 = arith.constant dense<0.000000e+00> : vector<8x64xf32>
    %170 = tpu.matmul %169, %163, %cst_33 {dimension_numbers = #tpu.dot_dimension_numbers<[1], [0], [0], [1], [0, 0, 1, 1], [], []>} : vector<8x32xbf16>, vector<32x64xbf16>, vector<8x64xf32> -> vector<8x64xf32>
    %c0_34 = arith.constant 0 : index
    %c0_35 = arith.constant 0 : index
    %171 = vector.load %arg9[%c0_34, %c0_35] : memref<1x64xf32, #tpu.memory_space<vmem>>, vector<1x64xf32>
    %172 = vector.broadcast %171 : vector<1x64xf32> to vector<8x64xf32>
    %173 = arith.addf %170, %172 : vector<8x64xf32>
    %cst_36 = arith.constant 0.000000e+00 : f32
    %174 = vector.broadcast %cst_36 : f32 to vector<8x64xf32>
    %c0_37 = arith.constant 0 : index
    %c0_38 = arith.constant 0 : index
    %175 = vector.load %arg5[%c0_37, %c0_38] : memref<64x256xbf16, #tpu.memory_space<vmem>>, vector<64x256xbf16>
    %176 = vector.extract_strided_slice %6 {offsets = [0, 256], sizes = [8, 256], strides = [1, 1]} : vector<64x512xf32> to vector<8x256xf32>
    %177 = arith.truncf %173 : vector<8x64xf32> to vector<8x64xbf16>
    %cst_39 = arith.constant dense<0.000000e+00> : vector<8x256xf32>
    %178 = tpu.matmul %177, %175, %cst_39 {dimension_numbers = #tpu.dot_dimension_numbers<[1], [0], [0], [1], [0, 0, 1, 1], [], []>} : vector<8x64xbf16>, vector<64x256xbf16>, vector<8x256xf32> -> vector<8x256xf32>
    %179 = arith.addf %176, %178 : vector<8x256xf32>
    %180 = arith.negf %179 : vector<8x256xf32>
    %181 = math.exp %180 : vector<8x256xf32>
    %cst_40 = arith.constant 1.000000e+00 : f32
    %182 = vector.broadcast %cst_40 : f32 to vector<8x256xf32>
    %183 = arith.addf %182, %181 : vector<8x256xf32>
    %184 = arith.divf %182, %183 : vector<8x256xf32>
    %185 = math.tanh %179 : vector<8x256xf32>
    %186 = vector.extract_strided_slice %184 {offsets = [0, 64], sizes = [8, 64], strides = [1, 1]} : vector<8x256xf32> to vector<8x64xf32>
    %187 = arith.mulf %186, %174 : vector<8x64xf32>
    %188 = vector.extract_strided_slice %184 {offsets = [0, 0], sizes = [8, 64], strides = [1, 1]} : vector<8x256xf32> to vector<8x64xf32>
    %189 = vector.extract_strided_slice %185 {offsets = [0, 192], sizes = [8, 64], strides = [1, 1]} : vector<8x256xf32> to vector<8x64xf32>
    %190 = arith.mulf %188, %189 : vector<8x64xf32>
    %191 = arith.addf %187, %190 : vector<8x64xf32>
    %192 = vector.extract_strided_slice %184 {offsets = [0, 128], sizes = [8, 64], strides = [1, 1]} : vector<8x256xf32> to vector<8x64xf32>
    %193 = math.tanh %191 : vector<8x64xf32>
    %194 = arith.mulf %192, %193 : vector<8x64xf32>
    %195 = vector.extract_strided_slice %6 {offsets = [8, 256], sizes = [8, 256], strides = [1, 1]} : vector<64x512xf32> to vector<8x256xf32>
    %196 = arith.truncf %194 : vector<8x64xf32> to vector<8x64xbf16>
    %cst_41 = arith.constant dense<0.000000e+00> : vector<8x256xf32>
    %197 = tpu.matmul %196, %175, %cst_41 {dimension_numbers = #tpu.dot_dimension_numbers<[1], [0], [0], [1], [0, 0, 1, 1], [], []>} : vector<8x64xbf16>, vector<64x256xbf16>, vector<8x256xf32> -> vector<8x256xf32>
    %198 = arith.addf %195, %197 : vector<8x256xf32>
    %199 = arith.negf %198 : vector<8x256xf32>
    %200 = math.exp %199 : vector<8x256xf32>
    %cst_42 = arith.constant 1.000000e+00 : f32
    %201 = vector.broadcast %cst_42 : f32 to vector<8x256xf32>
    %202 = arith.addf %201, %200 : vector<8x256xf32>
    %203 = arith.divf %201, %202 : vector<8x256xf32>
    %204 = math.tanh %198 : vector<8x256xf32>
    %205 = vector.extract_strided_slice %203 {offsets = [0, 64], sizes = [8, 64], strides = [1, 1]} : vector<8x256xf32> to vector<8x64xf32>
    %206 = arith.mulf %205, %191 : vector<8x64xf32>
    %207 = vector.extract_strided_slice %203 {offsets = [0, 0], sizes = [8, 64], strides = [1, 1]} : vector<8x256xf32> to vector<8x64xf32>
    %208 = vector.extract_strided_slice %204 {offsets = [0, 192], sizes = [8, 64], strides = [1, 1]} : vector<8x256xf32> to vector<8x64xf32>
    %209 = arith.mulf %207, %208 : vector<8x64xf32>
    %210 = arith.addf %206, %209 : vector<8x64xf32>
    %211 = vector.extract_strided_slice %203 {offsets = [0, 128], sizes = [8, 64], strides = [1, 1]} : vector<8x256xf32> to vector<8x64xf32>
    %212 = math.tanh %210 : vector<8x64xf32>
    %213 = arith.mulf %211, %212 : vector<8x64xf32>
    %214 = tpu.concatenate %194, %213 in 1 : vector<8x64xf32>, vector<8x64xf32> -> vector<8x128xf32>
    %c0_43 = arith.constant 0 : index
    %c0_44 = arith.constant 0 : index
    %215 = vector.load %arg10[%c0_43, %c0_44] : memref<8x512xf32, #tpu.memory_space<vmem>>, vector<8x128xf32>
    tpu.vector_store %arg10[%c0_43, %c0_44], %214 {strides = array<i32>} : memref<8x512xf32, #tpu.memory_space<vmem>>, vector<8x128xf32>,
    %216 = vector.extract_strided_slice %6 {offsets = [16, 256], sizes = [8, 256], strides = [1, 1]} : vector<64x512xf32> to vector<8x256xf32>
    %217 = arith.truncf %213 : vector<8x64xf32> to vector<8x64xbf16>
    %cst_45 = arith.constant dense<0.000000e+00> : vector<8x256xf32>
    %218 = tpu.matmul %217, %175, %cst_45 {dimension_numbers = #tpu.dot_dimension_numbers<[1], [0], [0], [1], [0, 0, 1, 1], [], []>} : vector<8x64xbf16>, vector<64x256xbf16>, vector<8x256xf32> -> vector<8x256xf32>
    %219 = arith.addf %216, %218 : vector<8x256xf32>
    %220 = arith.negf %219 : vector<8x256xf32>
    %221 = math.exp %220 : vector<8x256xf32>
    %cst_46 = arith.constant 1.000000e+00 : f32
    %222 = vector.broadcast %cst_46 : f32 to vector<8x256xf32>
    %223 = arith.addf %222, %221 : vector<8x256xf32>
    %224 = arith.divf %222, %223 : vector<8x256xf32>
    %225 = math.tanh %219 : vector<8x256xf32>
    %226 = vector.extract_strided_slice %224 {offsets = [0, 64], sizes = [8, 64], strides = [1, 1]} : vector<8x256xf32> to vector<8x64xf32>
    %227 = arith.mulf %226, %210 : vector<8x64xf32>
    %228 = vector.extract_strided_slice %224 {offsets = [0, 0], sizes = [8, 64], strides = [1, 1]} : vector<8x256xf32> to vector<8x64xf32>
    %229 = vector.extract_strided_slice %225 {offsets = [0, 192], sizes = [8, 64], strides = [1, 1]} : vector<8x256xf32> to vector<8x64xf32>
    %230 = arith.mulf %228, %229 : vector<8x64xf32>
    %231 = arith.addf %227, %230 : vector<8x64xf32>
    %232 = vector.extract_strided_slice %224 {offsets = [0, 128], sizes = [8, 64], strides = [1, 1]} : vector<8x256xf32> to vector<8x64xf32>
    %233 = math.tanh %231 : vector<8x64xf32>
    %234 = arith.mulf %232, %233 : vector<8x64xf32>
    %235 = vector.extract_strided_slice %6 {offsets = [24, 256], sizes = [8, 256], strides = [1, 1]} : vector<64x512xf32> to vector<8x256xf32>
    %236 = arith.truncf %234 : vector<8x64xf32> to vector<8x64xbf16>
    %cst_47 = arith.constant dense<0.000000e+00> : vector<8x256xf32>
    %237 = tpu.matmul %236, %175, %cst_47 {dimension_numbers = #tpu.dot_dimension_numbers<[1], [0], [0], [1], [0, 0, 1, 1], [], []>} : vector<8x64xbf16>, vector<64x256xbf16>, vector<8x256xf32> -> vector<8x256xf32>
    %238 = arith.addf %235, %237 : vector<8x256xf32>
    %239 = arith.negf %238 : vector<8x256xf32>
    %240 = math.exp %239 : vector<8x256xf32>
    %cst_48 = arith.constant 1.000000e+00 : f32
    %241 = vector.broadcast %cst_48 : f32 to vector<8x256xf32>
    %242 = arith.addf %241, %240 : vector<8x256xf32>
    %243 = arith.divf %241, %242 : vector<8x256xf32>
    %244 = math.tanh %238 : vector<8x256xf32>
    %245 = vector.extract_strided_slice %243 {offsets = [0, 64], sizes = [8, 64], strides = [1, 1]} : vector<8x256xf32> to vector<8x64xf32>
    %246 = arith.mulf %245, %231 : vector<8x64xf32>
    %247 = vector.extract_strided_slice %243 {offsets = [0, 0], sizes = [8, 64], strides = [1, 1]} : vector<8x256xf32> to vector<8x64xf32>
    %248 = vector.extract_strided_slice %244 {offsets = [0, 192], sizes = [8, 64], strides = [1, 1]} : vector<8x256xf32> to vector<8x64xf32>
    %249 = arith.mulf %247, %248 : vector<8x64xf32>
    %250 = arith.addf %246, %249 : vector<8x64xf32>
    %251 = vector.extract_strided_slice %243 {offsets = [0, 128], sizes = [8, 64], strides = [1, 1]} : vector<8x256xf32> to vector<8x64xf32>
    %252 = math.tanh %250 : vector<8x64xf32>
    %253 = arith.mulf %251, %252 : vector<8x64xf32>
    %254 = tpu.concatenate %234, %253 in 1 : vector<8x64xf32>, vector<8x64xf32> -> vector<8x128xf32>
    %c0_49 = arith.constant 0 : index
    %c128 = arith.constant 128 : index
    %255 = vector.load %arg10[%c0_49, %c128] : memref<8x512xf32, #tpu.memory_space<vmem>>, vector<8x128xf32>
    tpu.vector_store %arg10[%c0_49, %c128], %254 {strides = array<i32>} : memref<8x512xf32, #tpu.memory_space<vmem>>, vector<8x128xf32>,
    %256 = vector.extract_strided_slice %6 {offsets = [32, 256], sizes = [8, 256], strides = [1, 1]} : vector<64x512xf32> to vector<8x256xf32>
    %257 = arith.truncf %253 : vector<8x64xf32> to vector<8x64xbf16>
    %cst_50 = arith.constant dense<0.000000e+00> : vector<8x256xf32>
    %258 = tpu.matmul %257, %175, %cst_50 {dimension_numbers = #tpu.dot_dimension_numbers<[1], [0], [0], [1], [0, 0, 1, 1], [], []>} : vector<8x64xbf16>, vector<64x256xbf16>, vector<8x256xf32> -> vector<8x256xf32>
    %259 = arith.addf %256, %258 : vector<8x256xf32>
    %260 = arith.negf %259 : vector<8x256xf32>
    %261 = math.exp %260 : vector<8x256xf32>
    %cst_51 = arith.constant 1.000000e+00 : f32
    %262 = vector.broadcast %cst_51 : f32 to vector<8x256xf32>
    %263 = arith.addf %262, %261 : vector<8x256xf32>
    %264 = arith.divf %262, %263 : vector<8x256xf32>
    %265 = math.tanh %259 : vector<8x256xf32>
    %266 = vector.extract_strided_slice %264 {offsets = [0, 64], sizes = [8, 64], strides = [1, 1]} : vector<8x256xf32> to vector<8x64xf32>
    %267 = arith.mulf %266, %250 : vector<8x64xf32>
    %268 = vector.extract_strided_slice %264 {offsets = [0, 0], sizes = [8, 64], strides = [1, 1]} : vector<8x256xf32> to vector<8x64xf32>
    %269 = vector.extract_strided_slice %265 {offsets = [0, 192], sizes = [8, 64], strides = [1, 1]} : vector<8x256xf32> to vector<8x64xf32>
    %270 = arith.mulf %268, %269 : vector<8x64xf32>
    %271 = arith.addf %267, %270 : vector<8x64xf32>
    %272 = vector.extract_strided_slice %264 {offsets = [0, 128], sizes = [8, 64], strides = [1, 1]} : vector<8x256xf32> to vector<8x64xf32>
    %273 = math.tanh %271 : vector<8x64xf32>
    %274 = arith.mulf %272, %273 : vector<8x64xf32>
    %275 = vector.extract_strided_slice %6 {offsets = [40, 256], sizes = [8, 256], strides = [1, 1]} : vector<64x512xf32> to vector<8x256xf32>
    %276 = arith.truncf %274 : vector<8x64xf32> to vector<8x64xbf16>
    %cst_52 = arith.constant dense<0.000000e+00> : vector<8x256xf32>
    %277 = tpu.matmul %276, %175, %cst_52 {dimension_numbers = #tpu.dot_dimension_numbers<[1], [0], [0], [1], [0, 0, 1, 1], [], []>} : vector<8x64xbf16>, vector<64x256xbf16>, vector<8x256xf32> -> vector<8x256xf32>
    %278 = arith.addf %275, %277 : vector<8x256xf32>
    %279 = arith.negf %278 : vector<8x256xf32>
    %280 = math.exp %279 : vector<8x256xf32>
    %cst_53 = arith.constant 1.000000e+00 : f32
    %281 = vector.broadcast %cst_53 : f32 to vector<8x256xf32>
    %282 = arith.addf %281, %280 : vector<8x256xf32>
    %283 = arith.divf %281, %282 : vector<8x256xf32>
    %284 = math.tanh %278 : vector<8x256xf32>
    %285 = vector.extract_strided_slice %283 {offsets = [0, 64], sizes = [8, 64], strides = [1, 1]} : vector<8x256xf32> to vector<8x64xf32>
    %286 = arith.mulf %285, %271 : vector<8x64xf32>
    %287 = vector.extract_strided_slice %283 {offsets = [0, 0], sizes = [8, 64], strides = [1, 1]} : vector<8x256xf32> to vector<8x64xf32>
    %288 = vector.extract_strided_slice %284 {offsets = [0, 192], sizes = [8, 64], strides = [1, 1]} : vector<8x256xf32> to vector<8x64xf32>
    %289 = arith.mulf %287, %288 : vector<8x64xf32>
    %290 = arith.addf %286, %289 : vector<8x64xf32>
    %291 = vector.extract_strided_slice %283 {offsets = [0, 128], sizes = [8, 64], strides = [1, 1]} : vector<8x256xf32> to vector<8x64xf32>
    %292 = math.tanh %290 : vector<8x64xf32>
    %293 = arith.mulf %291, %292 : vector<8x64xf32>
    %294 = tpu.concatenate %274, %293 in 1 : vector<8x64xf32>, vector<8x64xf32> -> vector<8x128xf32>
    %c0_54 = arith.constant 0 : index
    %c256 = arith.constant 256 : index
    %295 = vector.load %arg10[%c0_54, %c256] : memref<8x512xf32, #tpu.memory_space<vmem>>, vector<8x128xf32>
    tpu.vector_store %arg10[%c0_54, %c256], %294 {strides = array<i32>} : memref<8x512xf32, #tpu.memory_space<vmem>>, vector<8x128xf32>,
    %296 = vector.extract_strided_slice %6 {offsets = [48, 256], sizes = [8, 256], strides = [1, 1]} : vector<64x512xf32> to vector<8x256xf32>
    %297 = arith.truncf %293 : vector<8x64xf32> to vector<8x64xbf16>
    %cst_55 = arith.constant dense<0.000000e+00> : vector<8x256xf32>
    %298 = tpu.matmul %297, %175, %cst_55 {dimension_numbers = #tpu.dot_dimension_numbers<[1], [0], [0], [1], [0, 0, 1, 1], [], []>} : vector<8x64xbf16>, vector<64x256xbf16>, vector<8x256xf32> -> vector<8x256xf32>
    %299 = arith.addf %296, %298 : vector<8x256xf32>
    %300 = arith.negf %299 : vector<8x256xf32>
    %301 = math.exp %300 : vector<8x256xf32>
    %cst_56 = arith.constant 1.000000e+00 : f32
    %302 = vector.broadcast %cst_56 : f32 to vector<8x256xf32>
    %303 = arith.addf %302, %301 : vector<8x256xf32>
    %304 = arith.divf %302, %303 : vector<8x256xf32>
    %305 = math.tanh %299 : vector<8x256xf32>
    %306 = vector.extract_strided_slice %304 {offsets = [0, 64], sizes = [8, 64], strides = [1, 1]} : vector<8x256xf32> to vector<8x64xf32>
    %307 = arith.mulf %306, %290 : vector<8x64xf32>
    %308 = vector.extract_strided_slice %304 {offsets = [0, 0], sizes = [8, 64], strides = [1, 1]} : vector<8x256xf32> to vector<8x64xf32>
    %309 = vector.extract_strided_slice %305 {offsets = [0, 192], sizes = [8, 64], strides = [1, 1]} : vector<8x256xf32> to vector<8x64xf32>
    %310 = arith.mulf %308, %309 : vector<8x64xf32>
    %311 = arith.addf %307, %310 : vector<8x64xf32>
    %312 = vector.extract_strided_slice %304 {offsets = [0, 128], sizes = [8, 64], strides = [1, 1]} : vector<8x256xf32> to vector<8x64xf32>
    %313 = math.tanh %311 : vector<8x64xf32>
    %314 = arith.mulf %312, %313 : vector<8x64xf32>
    %315 = vector.extract_strided_slice %6 {offsets = [56, 256], sizes = [8, 256], strides = [1, 1]} : vector<64x512xf32> to vector<8x256xf32>
    %316 = arith.truncf %314 : vector<8x64xf32> to vector<8x64xbf16>
    %cst_57 = arith.constant dense<0.000000e+00> : vector<8x256xf32>
    %317 = tpu.matmul %316, %175, %cst_57 {dimension_numbers = #tpu.dot_dimension_numbers<[1], [0], [0], [1], [0, 0, 1, 1], [], []>} : vector<8x64xbf16>, vector<64x256xbf16>, vector<8x256xf32> -> vector<8x256xf32>
    %318 = arith.addf %315, %317 : vector<8x256xf32>
    %319 = arith.negf %318 : vector<8x256xf32>
    %320 = math.exp %319 : vector<8x256xf32>
    %cst_58 = arith.constant 1.000000e+00 : f32
    %321 = vector.broadcast %cst_58 : f32 to vector<8x256xf32>
    %322 = arith.addf %321, %320 : vector<8x256xf32>
    %323 = arith.divf %321, %322 : vector<8x256xf32>
    %324 = math.tanh %318 : vector<8x256xf32>
    %325 = vector.extract_strided_slice %323 {offsets = [0, 64], sizes = [8, 64], strides = [1, 1]} : vector<8x256xf32> to vector<8x64xf32>
    %326 = arith.mulf %325, %311 : vector<8x64xf32>
    %327 = vector.extract_strided_slice %323 {offsets = [0, 0], sizes = [8, 64], strides = [1, 1]} : vector<8x256xf32> to vector<8x64xf32>
    %328 = vector.extract_strided_slice %324 {offsets = [0, 192], sizes = [8, 64], strides = [1, 1]} : vector<8x256xf32> to vector<8x64xf32>
    %329 = arith.mulf %327, %328 : vector<8x64xf32>
    %330 = arith.addf %326, %329 : vector<8x64xf32>
    %331 = vector.extract_strided_slice %323 {offsets = [0, 128], sizes = [8, 64], strides = [1, 1]} : vector<8x256xf32> to vector<8x64xf32>
    %332 = math.tanh %330 : vector<8x64xf32>
    %333 = arith.mulf %331, %332 : vector<8x64xf32>
    %334 = tpu.concatenate %314, %333 in 1 : vector<8x64xf32>, vector<8x64xf32> -> vector<8x128xf32>
    %c0_59 = arith.constant 0 : index
    %c384 = arith.constant 384 : index
    %335 = vector.load %arg10[%c0_59, %c384] : memref<8x512xf32, #tpu.memory_space<vmem>>, vector<8x128xf32>
    tpu.vector_store %arg10[%c0_59, %c384], %334 {strides = array<i32>} : memref<8x512xf32, #tpu.memory_space<vmem>>, vector<8x128xf32>,
    return
  }
  func.func @transform_0(%arg0: i32) -> (i32, i32, i32) {
    %c0_i32 = arith.constant 0 : i32
    %c0_i32_0 = arith.constant 0 : i32
    %c0_i32_1 = arith.constant 0 : i32
    return %arg0, %c0_i32, %c0_i32_0 : i32, i32, i32
  }
  func.func @transform_1(%arg0: i32) -> (i32, i32) {
    %c0_i32 = arith.constant 0 : i32
    %c0_i32_0 = arith.constant 0 : i32
    %c0_i32_1 = arith.constant 0 : i32
    return %c0_i32, %c0_i32_0 : i32, i32
  }
  func.func @transform_2(%arg0: i32) -> (i32, i32) {
    %c0_i32 = arith.constant 0 : i32
    %c0_i32_0 = arith.constant 0 : i32
    %c0_i32_1 = arith.constant 0 : i32
    return %c0_i32, %c0_i32_0 : i32, i32
  }
  func.func @transform_3(%arg0: i32) -> (i32, i32) {
    %c0_i32 = arith.constant 0 : i32
    %c0_i32_0 = arith.constant 0 : i32
    %c0_i32_1 = arith.constant 0 : i32
    return %c0_i32, %c0_i32_0 : i32, i32
  }
  func.func @transform_4(%arg0: i32) -> (i32, i32) {
    %c0_i32 = arith.constant 0 : i32
    %c0_i32_0 = arith.constant 0 : i32
    %c0_i32_1 = arith.constant 0 : i32
    return %c0_i32, %c0_i32_0 : i32, i32
  }
  func.func @transform_5(%arg0: i32) -> (i32, i32) {
    %c0_i32 = arith.constant 0 : i32
    %c0_i32_0 = arith.constant 0 : i32
    %c0_i32_1 = arith.constant 0 : i32
    return %c0_i32, %c0_i32_0 : i32, i32
  }
  func.func @transform_6(%arg0: i32) -> (i32, i32) {
    %c0_i32 = arith.constant 0 : i32
    %c0_i32_0 = arith.constant 0 : i32
    %c0_i32_1 = arith.constant 0 : i32
    return %c0_i32, %c0_i32_0 : i32, i32
  }
  func.func @transform_7(%arg0: i32) -> (i32, i32) {
    %c0_i32 = arith.constant 0 : i32
    %c0_i32_0 = arith.constant 0 : i32
    %c0_i32_1 = arith.constant 0 : i32
    return %c0_i32, %c0_i32_0 : i32, i32
  }
  func.func @transform_8(%arg0: i32) -> (i32, i32) {
    %c0_i32 = arith.constant 0 : i32
    %c0_i32_0 = arith.constant 0 : i32
    %c0_i32_1 = arith.constant 0 : i32
    return %c0_i32, %c0_i32_0 : i32, i32
  }
  func.func @transform_9(%arg0: i32) -> (i32, i32) {
    %c0_i32 = arith.constant 0 : i32
    %c0_i32_0 = arith.constant 0 : i32
    return %arg0, %c0_i32 : i32, i32
  }
}

</mosaic_0001>

<llo_original>
// kernel: rnn_autoencoder_forward.1
$region0: #{rnn_autoencoder_forward.1}
  #allocation0 [shape = 'u32[]', space=smem, size = 0x4, offset = 0x4, fixed_abs, tag = 'smem constant byte address 0x4 - core index']
  #allocation1 [shape = 'u32[144,128]{1,0:T(1,128)}', space=vmem, size = 0x12000, scoped, tag = 'internal scratch']
  %s0 = inlined_call_operand.vmem [shape: bf16[1,64,64], index: 0, kind: input, shape index: {}]
  %s1 = inlined_call_operand.vmem [shape: bf16[64,512], index: 1, kind: input, shape index: {}]
  %s2 = inlined_call_operand.vmem [shape: f32[1,512], index: 2, kind: input, shape index: {}]
  %s3 = inlined_call_operand.hbm [shape: bf16[64,256], index: 3, kind: input, shape index: {}]
  %s4 = inlined_call_operand.hbm [shape: bf16[64,256], index: 4, kind: input, shape index: {}]
  %s5 = inlined_call_operand.vmem [shape: bf16[64,32], index: 5, kind: input, shape index: {}]
  %s6 = inlined_call_operand.vmem [shape: f32[1,32], index: 6, kind: input, shape index: {}]
  %s7 = inlined_call_operand.vmem [shape: bf16[32,64], index: 7, kind: input, shape index: {}]
  %s8 = inlined_call_operand.vmem [shape: f32[1,64], index: 8, kind: input, shape index: {}]
  %s9 = inlined_call_operand.vmem [shape: f32[8,512], index: 9, kind: output, shape index: {}]
  %s10 = sld [smem:[#allocation0]]
  $region54: #{rnn_autoencoder_forward.1} parent=0
    _
  %s12 = ssub.s32 1, %s10
  %s13 = scalar_select 0, %s12, %s10
  $region1: #{rnn_autoencoder_forward.1} parent=0
    #allocation2 [shape = 'u8[32768]{0}', space=vmem, size = 0x8000, scoped, tag = 'input window, operand 3, single buffered']
    #allocation3 [shape = 's32[1]{0}', space=sflag, size = 0x4, scoped, tag = 'scoped memory for rnn_autoencoder_forward.1']
    #allocation4 [shape = 'u8[32768]{0}', space=vmem, size = 0x8000, scoped, tag = 'input window, operand 4, single buffered']
    #allocation5 [shape = 's32[1]{0}', space=sflag, size = 0x4, scoped, tag = 'scoped memory for rnn_autoencoder_forward.1']
    %14 = vsyncpa [#allocation3], 0
    %15 = vsyncpa [#allocation5], 0
    // Predicated region
    $region2: #{rnn_autoencoder_forward.1} parent=1 // pred_check
      _
    $region3: #{rnn_autoencoder_forward.1} parent=1 // pred_check_branch
      %17 = sbr.rel (0) target = $region5
    $region4: #{rnn_autoencoder_forward.1} parent=1 // pred_region
      _
    $region5: #{rnn_autoencoder_forward.1} parent=1 // pred_fallthru
      _
    // Predicated region
    $region6: #{rnn_autoencoder_forward.1} parent=1 // pred_check
      _
    $region7: #{rnn_autoencoder_forward.1} parent=1 // pred_check_branch
      %19 = sbr.rel (0) target = $region9
    $region8: #{rnn_autoencoder_forward.1} parent=1 // pred_region
      _
    $region9: #{rnn_autoencoder_forward.1} parent=1 // pred_fallthru
      _
    // Predicated region
    $region10: #{rnn_autoencoder_forward.1} parent=1 // pred_check
      _
    $region11: #{rnn_autoencoder_forward.1} parent=1 // pred_check_branch
      %21 = sbr.rel (0) target = $region13
    $region12: #{rnn_autoencoder_forward.1} parent=1 // pred_region
      _
    $region13: #{rnn_autoencoder_forward.1} parent=1 // pred_fallthru
      _
    // Predicated region
    $region14: #{rnn_autoencoder_forward.1} parent=1 // pred_check
      _
    $region15: #{rnn_autoencoder_forward.1} parent=1 // pred_check_branch
      %23 = sbr.rel (0) target = $region17
    $region16: #{rnn_autoencoder_forward.1} parent=1 // pred_region
      %s25 = ssub.s32 1024, 1024
      %26 = vsyncadd [#allocation3], %s25
      %s27 = sshll.u32 [#allocation2], 4
      %s28 = int_to_ptr.vmem [resolvable:$true] %s27
      %33 = dma.hbm_to_vmem [thread:$0]  %s3, 1024, %s28, [#allocation3], 128, 128, 8
    $region17: #{rnn_autoencoder_forward.1} parent=1 // pred_fallthru
      _
    // Predicated region
    $region18: #{rnn_autoencoder_forward.1} parent=1 // pred_check
      _
    $region19: #{rnn_autoencoder_forward.1} parent=1 // pred_check_branch
      %35 = sbr.rel (0) target = $region21
    $region20: #{rnn_autoencoder_forward.1} parent=1 // pred_region
      %s37 = ssub.s32 1024, 1024
      %38 = vsyncadd [#allocation5], %s37
      %s39 = sshll.u32 [#allocation4], 4
      %s40 = int_to_ptr.vmem [resolvable:$true] %s39
      %45 = dma.hbm_to_vmem [thread:$0]  %s4, 1024, %s40, [#allocation5], 128, 128, 8
    $region21: #{rnn_autoencoder_forward.1} parent=1 // pred_fallthru
      _
    // Predicated region
    $region22: #{rnn_autoencoder_forward.1} parent=1 // pred_check
      _
    $region23: #{rnn_autoencoder_forward.1} parent=1 // pred_check_branch
      %47 = sbr.rel (0) target = $region25
    $region24: #{rnn_autoencoder_forward.1} parent=1 // pred_region
      _
    $region25: #{rnn_autoencoder_forward.1} parent=1 // pred_fallthru
      _
    // Predicated region
    $region26: #{rnn_autoencoder_forward.1} parent=1 // pred_check
      _
    $region27: #{rnn_autoencoder_forward.1} parent=1 // pred_check_branch
      %49 = sbr.rel (0) target = $region29
    $region28: #{rnn_autoencoder_forward.1} parent=1 // pred_region
      _
    $region29: #{rnn_autoencoder_forward.1} parent=1 // pred_fallthru
      _
    // Predicated region
    $region30: #{rnn_autoencoder_forward.1} parent=1 // pred_check
      _
    $region31: #{rnn_autoencoder_forward.1} parent=1 // pred_check_branch
      %51 = sbr.rel (0) target = $region33
    $region32: #{rnn_autoencoder_forward.1} parent=1 // pred_region
      _
    $region33: #{rnn_autoencoder_forward.1} parent=1 // pred_fallthru
      _
    // Predicated region
    $region34: #{rnn_autoencoder_forward.1} parent=1 // pred_check
      _
    $region35: #{rnn_autoencoder_forward.1} parent=1 // pred_check_branch
      %53 = sbr.rel (0) target = $region37
    $region36: #{rnn_autoencoder_forward.1} parent=1 // pred_region
      _
    $region37: #{rnn_autoencoder_forward.1} parent=1 // pred_fallthru
      _
    // Predicated region
    $region38: #{rnn_autoencoder_forward.1} parent=1 // pred_check
      _
    $region39: #{rnn_autoencoder_forward.1} parent=1 // pred_check_branch
      %55 = sbr.rel (0) target = $region41
    $region40: #{rnn_autoencoder_forward.1} parent=1 // pred_region
      %56 = dma.done [#allocation3], 1024
    $region41: #{rnn_autoencoder_forward.1} parent=1 // pred_fallthru
      _
    // Predicated region
    $region42: #{rnn_autoencoder_forward.1} parent=1 // pred_check
      _
    $region43: #{rnn_autoencoder_forward.1} parent=1 // pred_check_branch
      %58 = sbr.rel (0) target = $region45
    $region44: #{rnn_autoencoder_forward.1} parent=1 // pred_region
      %59 = dma.done [#allocation5], 1024
    $region45: #{rnn_autoencoder_forward.1} parent=1 // pred_fallthru
      _
    %v61 = vld [vmem:[%s0] sm:$0xf]
    %v62 = vld [vmem:[%s0 + $0x4] sm:$0xf]
    %v63 = vld [vmem:[%s0 + $0x8] sm:$0xf]
    %v64 = vld [vmem:[%s0 + $0xc] sm:$0xf]
    %v65 = vld [vmem:[%s0 + $0x10] sm:$0xf]
    %v66 = vld [vmem:[%s0 + $0x14] sm:$0xf]
    %v67 = vld [vmem:[%s0 + $0x18] sm:$0xf]
    %v68 = vld [vmem:[%s0 + $0x1c] sm:$0xf]
    %v69 = vld [vmem:[%s1] sm:$0xff]
    %v70 = vld [vmem:[%s1 + $0x8] sm:$0xff]
    %v71 = vld [vmem:[%s1 + $0x10] sm:$0xff]
    %v72 = vld [vmem:[%s1 + $0x18] sm:$0xff]
    %v73 = vld [vmem:[%s1 + $0x20] sm:$0xff]
    %v74 = vld [vmem:[%s1 + $0x28] sm:$0xff]
    %v75 = vld [vmem:[%s1 + $0x30] sm:$0xff]
    %v76 = vld [vmem:[%s1 + $0x38] sm:$0xff]
    %v77 = vld [vmem:[%s1 + $0x40] sm:$0xff]
    %v78 = vld [vmem:[%s1 + $0x48] sm:$0xff]
    %v79 = vld [vmem:[%s1 + $0x50] sm:$0xff]
    %v80 = vld [vmem:[%s1 + $0x58] sm:$0xff]
    %v81 = vld [vmem:[%s1 + $0x60] sm:$0xff]
    %v82 = vld [vmem:[%s1 + $0x68] sm:$0xff]
    %v83 = vld [vmem:[%s1 + $0x70] sm:$0xff]
    %v84 = vld [vmem:[%s1 + $0x78] sm:$0xff]
    %v85 = vld [vmem:[%s2] sm:$0xf]
    %v87 = vlaneseq
    %v88 = vshrl.u32 %v87, 7
    %v89 = vsub.s32 0, %v88
    %v90 = vrot.slane %v85, %v89
    %v91 = vlaneseq
    %v92 = vshrl.u32 %v91, 7
    %v93 = vsub.s32 1, %v92
    %v94 = vrot.slane %v85, %v93
    %v95 = vlaneseq
    %v96 = vshrl.u32 %v95, 7
    %v97 = vsub.s32 2, %v96
    %v98 = vrot.slane %v85, %v97
    %v99 = vlaneseq
    %v100 = vshrl.u32 %v99, 7
    %v101 = vsub.s32 3, %v100
    %v102 = vrot.slane %v85, %v101
    %v115 = vunpack.c.l.b16 %v61
    %v116 = vunpack.c.l.b16 %v62
    %v117 = vunpack.c.l.b16 %v63
    %v118 = vunpack.c.l.b16 %v64
    %v119 = vunpack.c.l.b16 %v65
    %v120 = vunpack.c.l.b16 %v66
    %v121 = vunpack.c.l.b16 %v67
    %v122 = vunpack.c.l.b16 %v68
    %v123 = vpack.c.b16 %v116, %v115
    %v124 = vpack.c.b16 %v118, %v117
    %v125 = vpack.c.b16 %v120, %v119
    %v126 = vpack.c.b16 %v122, %v121
    %v143 = vunpack.c.l.b16 %v69
    %v144 = vunpack.c.h.b16 %v69
    %v145 = vunpack.c.l.b16 %v70
    %v146 = vunpack.c.h.b16 %v70
    %v147 = vunpack.c.l.b16 %v71
    %v148 = vunpack.c.h.b16 %v71
    %v149 = vunpack.c.l.b16 %v72
    %v150 = vunpack.c.h.b16 %v72
    %v151 = vunpack.c.l.b16 %v73
    %v152 = vunpack.c.h.b16 %v73
    %v153 = vunpack.c.l.b16 %v74
    %v154 = vunpack.c.h.b16 %v74
    %v155 = vunpack.c.l.b16 %v75
    %v156 = vunpack.c.h.b16 %v75
    %v157 = vunpack.c.l.b16 %v76
    %v158 = vunpack.c.h.b16 %v76
    %v159 = vunpack.c.l.b16 %v77
    %v160 = vunpack.c.h.b16 %v77
    %v161 = vunpack.c.l.b16 %v78
    %v162 = vunpack.c.h.b16 %v78
    %v163 = vunpack.c.l.b16 %v79
    %v164 = vunpack.c.h.b16 %v79
    %v165 = vunpack.c.l.b16 %v80
    %v166 = vunpack.c.h.b16 %v80
    %v167 = vunpack.c.l.b16 %v81
    %v168 = vunpack.c.h.b16 %v81
    %v169 = vunpack.c.l.b16 %v82
    %v170 = vunpack.c.h.b16 %v82
    %v171 = vunpack.c.l.b16 %v83
    %v172 = vunpack.c.h.b16 %v83
    %v173 = vunpack.c.l.b16 %v84
    %v174 = vunpack.c.h.b16 %v84
    %v175 = vpack.c.b16 %v147, %v143
    %v176 = vpack.c.b16 %v148, %v144
    %v177 = vpack.c.b16 %v149, %v145
    %v178 = vpack.c.b16 %v150, %v146
    %v179 = vpack.c.b16 %v155, %v151
    %v180 = vpack.c.b16 %v156, %v152
    %v181 = vpack.c.b16 %v157, %v153
    %v182 = vpack.c.b16 %v158, %v154
    %v183 = vpack.c.b16 %v163, %v159
    %v184 = vpack.c.b16 %v164, %v160
    %v185 = vpack.c.b16 %v165, %v161
    %v186 = vpack.c.b16 %v166, %v162
    %v187 = vpack.c.b16 %v171, %v167
    %v188 = vpack.c.b16 %v172, %v168
    %v189 = vpack.c.b16 %v173, %v169
    %v190 = vpack.c.b16 %v174, %v170
    %vm207 = vcmask 523264
    %v209 = vsel %vm207, %v123, 0
    %v212 = vsel %vm207, %v124, 0
    %v215 = vsel %vm207, %v125, 0
    %v218 = vsel %vm207, %v126, 0
    %220 = vmatprep.subr.bf16.mxu0 0
    %221 = vmatpush1.bf16.msra.mxu0 0
    %222 = vmatprep.subr.bf16.mxu0 0
    %223 = vmatpush1.bf16.msra.mxu0 0
    %224 = vmatprep.subr.bf16.mxu0 0
    %225 = vmatpush1.bf16.msra.mxu0 0
    %226 = vmatprep.subr.bf16.mxu0 0
    %227 = vmatpush1.bf16.msra.mxu0 0
    %228 = vmatprep.subr.bf16.mxu0 %v188
    %229 = vmatpush1.bf16.msra.mxu0 %v187
    %230 = vmatprep.subr.bf16.mxu0 %v184
    %231 = vmatpush1.bf16.msra.mxu0 %v183
    %232 = vmatprep.subr.bf16.mxu0 %v180
    %233 = vmatpush1.bf16.msra.mxu0 %v179
    %234 = vmatprep.subr.bf16.mxu0 %v176
    %235 = vmatpush1.bf16.msra.mxu0 %v175
    %236 = vmatprep.subr.bf16.mxu0 0
    %237 = vmatpush2.bf16.msra.mxu0 0
    %238 = vmatprep.subr.bf16.mxu0 0
    %239 = vmatpush2.bf16.msra.mxu0 0
    %240 = vmatprep.subr.bf16.mxu0 0
    %241 = vmatpush2.bf16.msra.mxu0 0
    %242 = vmatprep.subr.bf16.mxu0 0
    %243 = vmatpush2.bf16.msra.mxu0 0
    %244 = vmatprep.subr.bf16.mxu0 0
    %245 = vmatpush2.bf16.msra.mxu0 0
    %246 = vmatprep.subr.bf16.mxu0 0
    %247 = vmatpush2.bf16.msra.mxu0 0
    %248 = vmatprep.subr.bf16.mxu0 0
    %249 = vmatpush2.bf16.msra.mxu0 0
    %250 = vmatprep.subr.bf16.mxu0 0
    %251 = vmatpush2.bf16.msra.mxu0 0
    %252 = vmatprep.mubr.bf16.mxu0 0
    %253 = vmatmul.mubr.bf16.gmra.mxu0 %v209
    %v254 = vpop.f32.mrf.mxu0
    %v255 = vadd.f32 %v90, %v254
    %v256 = vpop.f32.mrf.mxu0
    %v257 = vadd.f32 %v94, %v256
    %v258 = vpop.f32.mrf.mxu0
    %v259 = vadd.f32 %v90, %v258
    %v260 = vpop.f32.mrf.mxu0
    %v261 = vadd.f32 %v94, %v260
    %262 = vmatprep.mubr.bf16.mxu0 0
    %263 = vmatmul.mubr.bf16.gmra.mxu0 %v212
    %v264 = vpop.f32.mrf.mxu0
    %v265 = vadd.f32 %v90, %v264
    %v266 = vpop.f32.mrf.mxu0
    %v267 = vadd.f32 %v94, %v266
    %v268 = vpop.f32.mrf.mxu0
    %v269 = vadd.f32 %v90, %v268
    %v270 = vpop.f32.mrf.mxu0
    %v271 = vadd.f32 %v94, %v270
    %272 = vmatprep.mubr.bf16.mxu0 0
    %273 = vmatmul.mubr.bf16.gmra.mxu0 %v215
    %v274 = vpop.f32.mrf.mxu0
    %v275 = vadd.f32 %v90, %v274
    %v276 = vpop.f32.mrf.mxu0
    %v277 = vadd.f32 %v94, %v276
    %v278 = vpop.f32.mrf.mxu0
    %v279 = vadd.f32 %v90, %v278
    %v280 = vpop.f32.mrf.mxu0
    %v281 = vadd.f32 %v94, %v280
    %282 = vmatprep.mubr.bf16.mxu0 0
    %283 = vmatmul.mubr.bf16.gmra.mxu0 %v218
    %v284 = vpop.f32.mrf.mxu0
    %v285 = vadd.f32 %v90, %v284
    %v286 = vpop.f32.mrf.mxu0
    %v287 = vadd.f32 %v94, %v286
    %v288 = vpop.f32.mrf.mxu0
    %v289 = vadd.f32 %v90, %v288
    %v290 = vpop.f32.mrf.mxu0
    %v291 = vadd.f32 %v94, %v290
    %292 = vdwg.mxu0
    %293 = vmatprep.subr.bf16.mxu0 0
    %294 = vmatpush1.bf16.msra.mxu0 0
    %295 = vmatprep.subr.bf16.mxu0 0
    %296 = vmatpush1.bf16.msra.mxu0 0
    %297 = vmatprep.subr.bf16.mxu0 0
    %298 = vmatpush1.bf16.msra.mxu0 0
    %299 = vmatprep.subr.bf16.mxu0 0
    %300 = vmatpush1.bf16.msra.mxu0 0
    %301 = vmatprep.subr.bf16.mxu0 %v190
    %302 = vmatpush1.bf16.msra.mxu0 %v189
    %303 = vmatprep.subr.bf16.mxu0 %v186
    %304 = vmatpush1.bf16.msra.mxu0 %v185
    %305 = vmatprep.subr.bf16.mxu0 %v182
    %306 = vmatpush1.bf16.msra.mxu0 %v181
    %307 = vmatprep.subr.bf16.mxu0 %v178
    %308 = vmatpush1.bf16.msra.mxu0 %v177
    %309 = vmatprep.subr.bf16.mxu0 0
    %310 = vmatpush2.bf16.msra.mxu0 0
    %311 = vmatprep.subr.bf16.mxu0 0
    %312 = vmatpush2.bf16.msra.mxu0 0
    %313 = vmatprep.subr.bf16.mxu0 0
    %314 = vmatpush2.bf16.msra.mxu0 0
    %315 = vmatprep.subr.bf16.mxu0 0
    %316 = vmatpush2.bf16.msra.mxu0 0
    %317 = vmatprep.subr.bf16.mxu0 0
    %318 = vmatpush2.bf16.msra.mxu0 0
    %319 = vmatprep.subr.bf16.mxu0 0
    %320 = vmatpush2.bf16.msra.mxu0 0
    %321 = vmatprep.subr.bf16.mxu0 0
    %322 = vmatpush2.bf16.msra.mxu0 0
    %323 = vmatprep.subr.bf16.mxu0 0
    %324 = vmatpush2.bf16.msra.mxu0 0
    %325 = vmatprep.mubr.bf16.mxu0 0
    %326 = vmatmul.mubr.bf16.gmra.mxu0 %v209
    %v327 = vpop.f32.mrf.mxu0
    %v328 = vadd.f32 %v98, %v327
    %v329 = vpop.f32.mrf.mxu0
    %v330 = vadd.f32 %v102, %v329
    %v331 = vpop.f32.mrf.mxu0
    %v332 = vadd.f32 %v98, %v331
    %v333 = vpop.f32.mrf.mxu0
    %v334 = vadd.f32 %v102, %v333
    %335 = vmatprep.mubr.bf16.mxu0 0
    %336 = vmatmul.mubr.bf16.gmra.mxu0 %v212
    %v337 = vpop.f32.mrf.mxu0
    %v338 = vadd.f32 %v98, %v337
    %v339 = vpop.f32.mrf.mxu0
    %v340 = vadd.f32 %v102, %v339
    %v341 = vpop.f32.mrf.mxu0
    %v342 = vadd.f32 %v98, %v341
    %v343 = vpop.f32.mrf.mxu0
    %v344 = vadd.f32 %v102, %v343
    %345 = vmatprep.mubr.bf16.mxu0 0
    %346 = vmatmul.mubr.bf16.gmra.mxu0 %v215
    %v347 = vpop.f32.mrf.mxu0
    %v348 = vadd.f32 %v98, %v347
    %v349 = vpop.f32.mrf.mxu0
    %v350 = vadd.f32 %v102, %v349
    %v351 = vpop.f32.mrf.mxu0
    %v352 = vadd.f32 %v98, %v351
    %v353 = vpop.f32.mrf.mxu0
    %v354 = vadd.f32 %v102, %v353
    %355 = vmatprep.mubr.bf16.mxu0 0
    %356 = vmatmul.mubr.bf16.gmra.mxu0 %v218
    %v357 = vpop.f32.mrf.mxu0
    %v358 = vadd.f32 %v98, %v357
    %v359 = vpop.f32.mrf.mxu0
    %v360 = vadd.f32 %v102, %v359
    %v361 = vpop.f32.mrf.mxu0
    %v362 = vadd.f32 %v98, %v361
    %v363 = vpop.f32.mrf.mxu0
    %v364 = vadd.f32 %v102, %v363
    %365 = vdwg.mxu0
    %v366 = vld [vmem:[#allocation2] sm:$0xff]
    %v367 = vld [vmem:[#allocation2 + $0x8] sm:$0xff]
    %v368 = vld [vmem:[#allocation2 + $0x10] sm:$0xff]
    %v369 = vld [vmem:[#allocation2 + $0x18] sm:$0xff]
    %v370 = vld [vmem:[#allocation2 + $0x20] sm:$0xff]
    %v371 = vld [vmem:[#allocation2 + $0x28] sm:$0xff]
    %v372 = vld [vmem:[#allocation2 + $0x30] sm:$0xff]
    %v373 = vld [vmem:[#allocation2 + $0x38] sm:$0xff]
    %v382 = vunpack.c.l.b16 %v366
    %v383 = vunpack.c.h.b16 %v366
    %v384 = vunpack.c.l.b16 %v367
    %v385 = vunpack.c.h.b16 %v367
    %v386 = vunpack.c.l.b16 %v368
    %v387 = vunpack.c.h.b16 %v368
    %v388 = vunpack.c.l.b16 %v369
    %v389 = vunpack.c.h.b16 %v369
    %v390 = vunpack.c.l.b16 %v370
    %v391 = vunpack.c.h.b16 %v370
    %v392 = vunpack.c.l.b16 %v371
    %v393 = vunpack.c.h.b16 %v371
    %v394 = vunpack.c.l.b16 %v372
    %v395 = vunpack.c.h.b16 %v372
    %v396 = vunpack.c.l.b16 %v373
    %v397 = vunpack.c.h.b16 %v373
    %v398 = vpack.c.b16 %v384, %v382
    %v399 = vpack.c.b16 %v385, %v383
    %v400 = vpack.c.b16 %v388, %v386
    %v401 = vpack.c.b16 %v389, %v387
    %v402 = vpack.c.b16 %v392, %v390
    %v403 = vpack.c.b16 %v393, %v391
    %v404 = vpack.c.b16 %v396, %v394
    %v405 = vpack.c.b16 %v397, %v395
    %v415 = vsel %vm207, 0, 0
    %417 = vmatprep.subr.bf16.mxu0 0
    %418 = vmatpush1.bf16.msra.mxu0 0
    %419 = vmatprep.subr.bf16.mxu0 0
    %420 = vmatpush1.bf16.msra.mxu0 0
    %421 = vmatprep.subr.bf16.mxu0 0
    %422 = vmatpush1.bf16.msra.mxu0 0
    %423 = vmatprep.subr.bf16.mxu0 0
    %424 = vmatpush1.bf16.msra.mxu0 0
    %425 = vmatprep.subr.bf16.mxu0 %v405
    %426 = vmatpush1.bf16.msra.mxu0 %v404
    %427 = vmatprep.subr.bf16.mxu0 %v403
    %428 = vmatpush1.bf16.msra.mxu0 %v402
    %429 = vmatprep.subr.bf16.mxu0 %v401
    %430 = vmatpush1.bf16.msra.mxu0 %v400
    %431 = vmatprep.subr.bf16.mxu0 %v399
    %432 = vmatpush1.bf16.msra.mxu0 %v398
    %433 = vmatprep.subr.bf16.mxu0 0
    %434 = vmatpush2.bf16.msra.mxu0 0
    %435 = vmatprep.subr.bf16.mxu0 0
    %436 = vmatpush2.bf16.msra.mxu0 0
    %437 = vmatprep.subr.bf16.mxu0 0
    %438 = vmatpush2.bf16.msra.mxu0 0
    %439 = vmatprep.subr.bf16.mxu0 0
    %440 = vmatpush2.bf16.msra.mxu0 0
    %441 = vmatprep.subr.bf16.mxu0 0
    %442 = vmatpush2.bf16.msra.mxu0 0
    %443 = vmatprep.subr.bf16.mxu0 0
    %444 = vmatpush2.bf16.msra.mxu0 0
    %445 = vmatprep.subr.bf16.mxu0 0
    %446 = vmatpush2.bf16.msra.mxu0 0
    %447 = vmatprep.subr.bf16.mxu0 0
    %448 = vmatpush2.bf16.msra.mxu0 0
    %449 = vmatprep.mubr.bf16.mxu0 0
    %450 = vmatmul.mubr.bf16.gmra.mxu0 %v415
    %v451 = vpop.f32.mrf.mxu0
    %v452 = vadd.f32 0.0, %v451
    %v453 = vpop.f32.mrf.mxu0
    %v454 = vadd.f32 0.0, %v453
    %v455 = vpop.f32.mrf.mxu0
    %v456 = vpop.f32.mrf.mxu0
    %457 = vdwg.mxu0
    %v458 = vadd.f32 %v255, %v452
    %v459 = vadd.f32 %v257, %v454
    %v460 = vxor.u32 %v458, 2147483648
    %v461 = vxor.u32 %v459, 2147483648
    %v462 = vmul.f32 %v460, 1.442695
    %v463 = vpow.pop %v462
    %v464 = vmul.f32 %v461, 1.442695
    %v465 = vpow.pop %v464
    %v466 = vadd.f32 %v463, 1.0
    %v467 = vadd.f32 %v465, 1.0
    %v468 = vrcp.pop %v466
    %v469 = vmul.f32 1.0, %v468
    %v470 = vrcp.pop %v467
    %v471 = vmul.f32 1.0, %v470
    %v472 = vtanh.pop %v459
    %v473 = vmul.f32 %v469, 0.0
    %475 = vrot.lane.b32.xlu0 %v472, 64
    %v476 = vpop.permute.xlu0 %475
    %v478 = vmul.f32 %v469, %v476
    %480 = vrot.lane.b32.xlu0 %v478, 64
    %v481 = vpop.permute.xlu0 %480
    %v483 = vadd.f32 %v473, %v481
    %v484 = vtanh.pop %v483
    %486 = vrot.lane.b32.xlu0 %v484, 64
    %v487 = vpop.permute.xlu0 %486
    %v489 = vmul.f32 %v471, %v487
    %v490 = vpack.c.bf16 %v489, %v489
    %v492 = vsel %vm207, %v490, 0
    %494 = vmatprep.subr.bf16.mxu0 0
    %495 = vmatpush1.bf16.msra.mxu0 0
    %496 = vmatprep.subr.bf16.mxu0 0
    %497 = vmatpush1.bf16.msra.mxu0 0
    %498 = vmatprep.subr.bf16.mxu0 0
    %499 = vmatpush1.bf16.msra.mxu0 0
    %500 = vmatprep.subr.bf16.mxu0 0
    %501 = vmatpush1.bf16.msra.mxu0 0
    %502 = vmatprep.subr.bf16.mxu0 %v405
    %503 = vmatpush1.bf16.msra.mxu0 %v404
    %504 = vmatprep.subr.bf16.mxu0 %v403
    %505 = vmatpush1.bf16.msra.mxu0 %v402
    %506 = vmatprep.subr.bf16.mxu0 %v401
    %507 = vmatpush1.bf16.msra.mxu0 %v400
    %508 = vmatprep.subr.bf16.mxu0 %v399
    %509 = vmatpush1.bf16.msra.mxu0 %v398
    %510 = vmatprep.subr.bf16.mxu0 0
    %511 = vmatpush2.bf16.msra.mxu0 0
    %512 = vmatprep.subr.bf16.mxu0 0
    %513 = vmatpush2.bf16.msra.mxu0 0
    %514 = vmatprep.subr.bf16.mxu0 0
    %515 = vmatpush2.bf16.msra.mxu0 0
    %516 = vmatprep.subr.bf16.mxu0 0
    %517 = vmatpush2.bf16.msra.mxu0 0
    %518 = vmatprep.subr.bf16.mxu0 0
    %519 = vmatpush2.bf16.msra.mxu0 0
    %520 = vmatprep.subr.bf16.mxu0 0
    %521 = vmatpush2.bf16.msra.mxu0 0
    %522 = vmatprep.subr.bf16.mxu0 0
    %523 = vmatpush2.bf16.msra.mxu0 0
    %524 = vmatprep.subr.bf16.mxu0 0
    %525 = vmatpush2.bf16.msra.mxu0 0
    %526 = vmatprep.mubr.bf16.mxu0 0
    %527 = vmatmul.mubr.bf16.gmra.mxu0 %v492
    %v528 = vpop.f32.mrf.mxu0
    %v529 = vadd.f32 0.0, %v528
    %v530 = vpop.f32.mrf.mxu0
    %v531 = vadd.f32 0.0, %v530
    %v532 = vpop.f32.mrf.mxu0
    %v533 = vpop.f32.mrf.mxu0
    %534 = vdwg.mxu0
    %v535 = vadd.f32 %v259, %v529
    %v536 = vadd.f32 %v261, %v531
    %v537 = vxor.u32 %v535, 2147483648
    %v538 = vxor.u32 %v536, 2147483648
    %v539 = vmul.f32 %v537, 1.442695
    %v540 = vpow.pop %v539
    %v541 = vmul.f32 %v538, 1.442695
    %v542 = vpow.pop %v541
    %v543 = vadd.f32 %v540, 1.0
    %v544 = vadd.f32 %v542, 1.0
    %v545 = vrcp.pop %v543
    %v546 = vmul.f32 1.0, %v545
    %v547 = vrcp.pop %v544
    %v548 = vmul.f32 1.0, %v547
    %v549 = vtanh.pop %v536
    %v550 = vmul.f32 %v546, %v483
    %552 = vrot.lane.b32.xlu0 %v549, 64
    %v553 = vpop.permute.xlu0 %552
    %v555 = vmul.f32 %v546, %v553
    %557 = vrot.lane.b32.xlu0 %v555, 64
    %v558 = vpop.permute.xlu0 %557
    %v560 = vadd.f32 %v550, %v558
    %v561 = vtanh.pop %v560
    %563 = vrot.lane.b32.xlu0 %v561, 64
    %v564 = vpop.permute.xlu0 %563
    %v566 = vmul.f32 %v548, %v564
    %v567 = vpack.c.bf16 %v566, %v566
    %v569 = vsel %vm207, %v567, 0
    %571 = vmatprep.subr.bf16.mxu0 0
    %572 = vmatpush1.bf16.msra.mxu0 0
    %573 = vmatprep.subr.bf16.mxu0 0
    %574 = vmatpush1.bf16.msra.mxu0 0
    %575 = vmatprep.subr.bf16.mxu0 0
    %576 = vmatpush1.bf16.msra.mxu0 0
    %577 = vmatprep.subr.bf16.mxu0 0
    %578 = vmatpush1.bf16.msra.mxu0 0
    %579 = vmatprep.subr.bf16.mxu0 %v405
    %580 = vmatpush1.bf16.msra.mxu0 %v404
    %581 = vmatprep.subr.bf16.mxu0 %v403
    %582 = vmatpush1.bf16.msra.mxu0 %v402
    %583 = vmatprep.subr.bf16.mxu0 %v401
    %584 = vmatpush1.bf16.msra.mxu0 %v400
    %585 = vmatprep.subr.bf16.mxu0 %v399
    %586 = vmatpush1.bf16.msra.mxu0 %v398
    %587 = vmatprep.subr.bf16.mxu0 0
    %588 = vmatpush2.bf16.msra.mxu0 0
    %589 = vmatprep.subr.bf16.mxu0 0
    %590 = vmatpush2.bf16.msra.mxu0 0
    %591 = vmatprep.subr.bf16.mxu0 0
    %592 = vmatpush2.bf16.msra.mxu0 0
    %593 = vmatprep.subr.bf16.mxu0 0
    %594 = vmatpush2.bf16.msra.mxu0 0
    %595 = vmatprep.subr.bf16.mxu0 0
    %596 = vmatpush2.bf16.msra.mxu0 0
    %597 = vmatprep.subr.bf16.mxu0 0
    %598 = vmatpush2.bf16.msra.mxu0 0
    %599 = vmatprep.subr.bf16.mxu0 0
    %600 = vmatpush2.bf16.msra.mxu0 0
    %601 = vmatprep.subr.bf16.mxu0 0
    %602 = vmatpush2.bf16.msra.mxu0 0
    %603 = vmatprep.mubr.bf16.mxu0 0
    %604 = vmatmul.mubr.bf16.gmra.mxu0 %v569
    %v605 = vpop.f32.mrf.mxu0
    %v606 = vadd.f32 0.0, %v605
    %v607 = vpop.f32.mrf.mxu0
    %v608 = vadd.f32 0.0, %v607
    %v609 = vpop.f32.mrf.mxu0
    %v610 = vpop.f32.mrf.mxu0
    %611 = vdwg.mxu0
    %v612 = vadd.f32 %v265, %v606
    %v613 = vadd.f32 %v267, %v608
    %v614 = vxor.u32 %v612, 2147483648
    %v615 = vxor.u32 %v613, 2147483648
    %v616 = vmul.f32 %v614, 1.442695
    %v617 = vpow.pop %v616
    %v618 = vmul.f32 %v615, 1.442695
    %v619 = vpow.pop %v618
    %v620 = vadd.f32 %v617, 1.0
    %v621 = vadd.f32 %v619, 1.0
    %v622 = vrcp.pop %v620
    %v623 = vmul.f32 1.0, %v622
    %v624 = vrcp.pop %v621
    %v625 = vmul.f32 1.0, %v624
    %v626 = vtanh.pop %v613
    %v627 = vmul.f32 %v623, %v560
    %629 = vrot.lane.b32.xlu0 %v626, 64
    %v630 = vpop.permute.xlu0 %629
    %v632 = vmul.f32 %v623, %v630
    %634 = vrot.lane.b32.xlu0 %v632, 64
    %v635 = vpop.permute.xlu0 %634
    %v637 = vadd.f32 %v627, %v635
    %v638 = vtanh.pop %v637
    %640 = vrot.lane.b32.xlu0 %v638, 64
    %v641 = vpop.permute.xlu0 %640
    %v643 = vmul.f32 %v625, %v641
    %v644 = vpack.c.bf16 %v643, %v643
    %v646 = vsel %vm207, %v644, 0
    %648 = vmatprep.subr.bf16.mxu0 0
    %649 = vmatpush1.bf16.msra.mxu0 0
    %650 = vmatprep.subr.bf16.mxu0 0
    %651 = vmatpush1.bf16.msra.mxu0 0
    %652 = vmatprep.subr.bf16.mxu0 0
    %653 = vmatpush1.bf16.msra.mxu0 0
    %654 = vmatprep.subr.bf16.mxu0 0
    %655 = vmatpush1.bf16.msra.mxu0 0
    %656 = vmatprep.subr.bf16.mxu0 %v405
    %657 = vmatpush1.bf16.msra.mxu0 %v404
    %658 = vmatprep.subr.bf16.mxu0 %v403
    %659 = vmatpush1.bf16.msra.mxu0 %v402
    %660 = vmatprep.subr.bf16.mxu0 %v401
    %661 = vmatpush1.bf16.msra.mxu0 %v400
    %662 = vmatprep.subr.bf16.mxu0 %v399
    %663 = vmatpush1.bf16.msra.mxu0 %v398
    %664 = vmatprep.subr.bf16.mxu0 0
    %665 = vmatpush2.bf16.msra.mxu0 0
    %666 = vmatprep.subr.bf16.mxu0 0
    %667 = vmatpush2.bf16.msra.mxu0 0
    %668 = vmatprep.subr.bf16.mxu0 0
    %669 = vmatpush2.bf16.msra.mxu0 0
    %670 = vmatprep.subr.bf16.mxu0 0
    %671 = vmatpush2.bf16.msra.mxu0 0
    %672 = vmatprep.subr.bf16.mxu0 0
    %673 = vmatpush2.bf16.msra.mxu0 0
    %674 = vmatprep.subr.bf16.mxu0 0
    %675 = vmatpush2.bf16.msra.mxu0 0
    %676 = vmatprep.subr.bf16.mxu0 0
    %677 = vmatpush2.bf16.msra.mxu0 0
    %678 = vmatprep.subr.bf16.mxu0 0
    %679 = vmatpush2.bf16.msra.mxu0 0
    %680 = vmatprep.mubr.bf16.mxu0 0
    %681 = vmatmul.mubr.bf16.gmra.mxu0 %v646
    %v682 = vpop.f32.mrf.mxu0
    %v683 = vadd.f32 0.0, %v682
    %v684 = vpop.f32.mrf.mxu0
    %v685 = vadd.f32 0.0, %v684
    %v686 = vpop.f32.mrf.mxu0
    %v687 = vpop.f32.mrf.mxu0
    %688 = vdwg.mxu0
    %v689 = vadd.f32 %v269, %v683
    %v690 = vadd.f32 %v271, %v685
    %v691 = vxor.u32 %v689, 2147483648
    %v692 = vxor.u32 %v690, 2147483648
    %v693 = vmul.f32 %v691, 1.442695
    %v694 = vpow.pop %v693
    %v695 = vmul.f32 %v692, 1.442695
    %v696 = vpow.pop %v695
    %v697 = vadd.f32 %v694, 1.0
    %v698 = vadd.f32 %v696, 1.0
    %v699 = vrcp.pop %v697
    %v700 = vmul.f32 1.0, %v699
    %v701 = vrcp.pop %v698
    %v702 = vmul.f32 1.0, %v701
    %v703 = vtanh.pop %v690
    %v704 = vmul.f32 %v700, %v637
    %706 = vrot.lane.b32.xlu0 %v703, 64
    %v707 = vpop.permute.xlu0 %706
    %v709 = vmul.f32 %v700, %v707
    %711 = vrot.lane.b32.xlu0 %v709, 64
    %v712 = vpop.permute.xlu0 %711
    %v714 = vadd.f32 %v704, %v712
    %v715 = vtanh.pop %v714
    %717 = vrot.lane.b32.xlu0 %v715, 64
    %v718 = vpop.permute.xlu0 %717
    %v720 = vmul.f32 %v702, %v718
    %v721 = vpack.c.bf16 %v720, %v720
    %v723 = vsel %vm207, %v721, 0
    %725 = vmatprep.subr.bf16.mxu0 0
    %726 = vmatpush1.bf16.msra.mxu0 0
    %727 = vmatprep.subr.bf16.mxu0 0
    %728 = vmatpush1.bf16.msra.mxu0 0
    %729 = vmatprep.subr.bf16.mxu0 0
    %730 = vmatpush1.bf16.msra.mxu0 0
    %731 = vmatprep.subr.bf16.mxu0 0
    %732 = vmatpush1.bf16.msra.mxu0 0
    %733 = vmatprep.subr.bf16.mxu0 %v405
    %734 = vmatpush1.bf16.msra.mxu0 %v404
    %735 = vmatprep.subr.bf16.mxu0 %v403
    %736 = vmatpush1.bf16.msra.mxu0 %v402
    %737 = vmatprep.subr.bf16.mxu0 %v401
    %738 = vmatpush1.bf16.msra.mxu0 %v400
    %739 = vmatprep.subr.bf16.mxu0 %v399
    %740 = vmatpush1.bf16.msra.mxu0 %v398
    %741 = vmatprep.subr.bf16.mxu0 0
    %742 = vmatpush2.bf16.msra.mxu0 0
    %743 = vmatprep.subr.bf16.mxu0 0
    %744 = vmatpush2.bf16.msra.mxu0 0
    %745 = vmatprep.subr.bf16.mxu0 0
    %746 = vmatpush2.bf16.msra.mxu0 0
    %747 = vmatprep.subr.bf16.mxu0 0
    %748 = vmatpush2.bf16.msra.mxu0 0
    %749 = vmatprep.subr.bf16.mxu0 0
    %750 = vmatpush2.bf16.msra.mxu0 0
    %751 = vmatprep.subr.bf16.mxu0 0
    %752 = vmatpush2.bf16.msra.mxu0 0
    %753 = vmatprep.subr.bf16.mxu0 0
    %754 = vmatpush2.bf16.msra.mxu0 0
    %755 = vmatprep.subr.bf16.mxu0 0
    %756 = vmatpush2.bf16.msra.mxu0 0
    %757 = vmatprep.mubr.bf16.mxu0 0
    %758 = vmatmul.mubr.bf16.gmra.mxu0 %v723
    %v759 = vpop.f32.mrf.mxu0
    %v760 = vadd.f32 0.0, %v759
    %v761 = vpop.f32.mrf.mxu0
    %v762 = vadd.f32 0.0, %v761
    %v763 = vpop.f32.mrf.mxu0
    %v764 = vpop.f32.mrf.mxu0
    %765 = vdwg.mxu0
    %v766 = vadd.f32 %v275, %v760
    %v767 = vadd.f32 %v277, %v762
    %v768 = vxor.u32 %v766, 2147483648
    %v769 = vxor.u32 %v767, 2147483648
    %v770 = vmul.f32 %v768, 1.442695
    %v771 = vpow.pop %v770
    %v772 = vmul.f32 %v769, 1.442695
    %v773 = vpow.pop %v772
    %v774 = vadd.f32 %v771, 1.0
    %v775 = vadd.f32 %v773, 1.0
    %v776 = vrcp.pop %v774
    %v777 = vmul.f32 1.0, %v776
    %v778 = vrcp.pop %v775
    %v779 = vmul.f32 1.0, %v778
    %v780 = vtanh.pop %v767
    %v781 = vmul.f32 %v777, %v714
    %783 = vrot.lane.b32.xlu0 %v780, 64
    %v784 = vpop.permute.xlu0 %783
    %v786 = vmul.f32 %v777, %v784
    %788 = vrot.lane.b32.xlu0 %v786, 64
    %v789 = vpop.permute.xlu0 %788
    %v791 = vadd.f32 %v781, %v789
    %v792 = vtanh.pop %v791
    %794 = vrot.lane.b32.xlu0 %v792, 64
    %v795 = vpop.permute.xlu0 %794
    %v797 = vmul.f32 %v779, %v795
    %v798 = vpack.c.bf16 %v797, %v797
    %v800 = vsel %vm207, %v798, 0
    %802 = vmatprep.subr.bf16.mxu0 0
    %803 = vmatpush1.bf16.msra.mxu0 0
    %804 = vmatprep.subr.bf16.mxu0 0
    %805 = vmatpush1.bf16.msra.mxu0 0
    %806 = vmatprep.subr.bf16.mxu0 0
    %807 = vmatpush1.bf16.msra.mxu0 0
    %808 = vmatprep.subr.bf16.mxu0 0
    %809 = vmatpush1.bf16.msra.mxu0 0
    %810 = vmatprep.subr.bf16.mxu0 %v405
    %811 = vmatpush1.bf16.msra.mxu0 %v404
    %812 = vmatprep.subr.bf16.mxu0 %v403
    %813 = vmatpush1.bf16.msra.mxu0 %v402
    %814 = vmatprep.subr.bf16.mxu0 %v401
    %815 = vmatpush1.bf16.msra.mxu0 %v400
    %816 = vmatprep.subr.bf16.mxu0 %v399
    %817 = vmatpush1.bf16.msra.mxu0 %v398
    %818 = vmatprep.subr.bf16.mxu0 0
    %819 = vmatpush2.bf16.msra.mxu0 0
    %820 = vmatprep.subr.bf16.mxu0 0
    %821 = vmatpush2.bf16.msra.mxu0 0
    %822 = vmatprep.subr.bf16.mxu0 0
    %823 = vmatpush2.bf16.msra.mxu0 0
    %824 = vmatprep.subr.bf16.mxu0 0
    %825 = vmatpush2.bf16.msra.mxu0 0
    %826 = vmatprep.subr.bf16.mxu0 0
    %827 = vmatpush2.bf16.msra.mxu0 0
    %828 = vmatprep.subr.bf16.mxu0 0
    %829 = vmatpush2.bf16.msra.mxu0 0
    %830 = vmatprep.subr.bf16.mxu0 0
    %831 = vmatpush2.bf16.msra.mxu0 0
    %832 = vmatprep.subr.bf16.mxu0 0
    %833 = vmatpush2.bf16.msra.mxu0 0
    %834 = vmatprep.mubr.bf16.mxu0 0
    %835 = vmatmul.mubr.bf16.gmra.mxu0 %v800
    %v836 = vpop.f32.mrf.mxu0
    %v837 = vadd.f32 0.0, %v836
    %v838 = vpop.f32.mrf.mxu0
    %v839 = vadd.f32 0.0, %v838
    %v840 = vpop.f32.mrf.mxu0
    %v841 = vpop.f32.mrf.mxu0
    %842 = vdwg.mxu0
    %v843 = vadd.f32 %v279, %v837
    %v844 = vadd.f32 %v281, %v839
    %v845 = vxor.u32 %v843, 2147483648
    %v846 = vxor.u32 %v844, 2147483648
    %v847 = vmul.f32 %v845, 1.442695
    %v848 = vpow.pop %v847
    %v849 = vmul.f32 %v846, 1.442695
    %v850 = vpow.pop %v849
    %v851 = vadd.f32 %v848, 1.0
    %v852 = vadd.f32 %v850, 1.0
    %v853 = vrcp.pop %v851
    %v854 = vmul.f32 1.0, %v853
    %v855 = vrcp.pop %v852
    %v856 = vmul.f32 1.0, %v855
    %v857 = vtanh.pop %v844
    %v858 = vmul.f32 %v854, %v791
    %860 = vrot.lane.b32.xlu0 %v857, 64
    %v861 = vpop.permute.xlu0 %860
    %v863 = vmul.f32 %v854, %v861
    %865 = vrot.lane.b32.xlu0 %v863, 64
    %v866 = vpop.permute.xlu0 %865
    %v868 = vadd.f32 %v858, %v866
    %v869 = vtanh.pop %v868
    %871 = vrot.lane.b32.xlu0 %v869, 64
    %v872 = vpop.permute.xlu0 %871
    %v874 = vmul.f32 %v856, %v872
    %v875 = vpack.c.bf16 %v874, %v874
    %v877 = vsel %vm207, %v875, 0
    %879 = vmatprep.subr.bf16.mxu0 0
    %880 = vmatpush1.bf16.msra.mxu0 0
    %881 = vmatprep.subr.bf16.mxu0 0
    %882 = vmatpush1.bf16.msra.mxu0 0
    %883 = vmatprep.subr.bf16.mxu0 0
    %884 = vmatpush1.bf16.msra.mxu0 0
    %885 = vmatprep.subr.bf16.mxu0 0
    %886 = vmatpush1.bf16.msra.mxu0 0
    %887 = vmatprep.subr.bf16.mxu0 %v405
    %888 = vmatpush1.bf16.msra.mxu0 %v404
    %889 = vmatprep.subr.bf16.mxu0 %v403
    %890 = vmatpush1.bf16.msra.mxu0 %v402
    %891 = vmatprep.subr.bf16.mxu0 %v401
    %892 = vmatpush1.bf16.msra.mxu0 %v400
    %893 = vmatprep.subr.bf16.mxu0 %v399
    %894 = vmatpush1.bf16.msra.mxu0 %v398
    %895 = vmatprep.subr.bf16.mxu0 0
    %896 = vmatpush2.bf16.msra.mxu0 0
    %897 = vmatprep.subr.bf16.mxu0 0
    %898 = vmatpush2.bf16.msra.mxu0 0
    %899 = vmatprep.subr.bf16.mxu0 0
    %900 = vmatpush2.bf16.msra.mxu0 0
    %901 = vmatprep.subr.bf16.mxu0 0
    %902 = vmatpush2.bf16.msra.mxu0 0
    %903 = vmatprep.subr.bf16.mxu0 0
    %904 = vmatpush2.bf16.msra.mxu0 0
    %905 = vmatprep.subr.bf16.mxu0 0
    %906 = vmatpush2.bf16.msra.mxu0 0
    %907 = vmatprep.subr.bf16.mxu0 0
    %908 = vmatpush2.bf16.msra.mxu0 0
    %909 = vmatprep.subr.bf16.mxu0 0
    %910 = vmatpush2.bf16.msra.mxu0 0
    %911 = vmatprep.mubr.bf16.mxu0 0
    %912 = vmatmul.mubr.bf16.gmra.mxu0 %v877
    %v913 = vpop.f32.mrf.mxu0
    %v914 = vadd.f32 0.0, %v913
    %v915 = vpop.f32.mrf.mxu0
    %v916 = vadd.f32 0.0, %v915
    %v917 = vpop.f32.mrf.mxu0
    %v918 = vpop.f32.mrf.mxu0
    %919 = vdwg.mxu0
    %v920 = vadd.f32 %v285, %v914
    %v921 = vadd.f32 %v287, %v916
    %v922 = vxor.u32 %v920, 2147483648
    %v923 = vxor.u32 %v921, 2147483648
    %v924 = vmul.f32 %v922, 1.442695
    %v925 = vpow.pop %v924
    %v926 = vmul.f32 %v923, 1.442695
    %v927 = vpow.pop %v926
    %v928 = vadd.f32 %v925, 1.0
    %v929 = vadd.f32 %v927, 1.0
    %v930 = vrcp.pop %v928
    %v931 = vmul.f32 1.0, %v930
    %v932 = vrcp.pop %v929
    %v933 = vmul.f32 1.0, %v932
    %v934 = vtanh.pop %v921
    %v935 = vmul.f32 %v931, %v868
    %937 = vrot.lane.b32.xlu0 %v934, 64
    %v938 = vpop.permute.xlu0 %937
    %v940 = vmul.f32 %v931, %v938
    %942 = vrot.lane.b32.xlu0 %v940, 64
    %v943 = vpop.permute.xlu0 %942
    %v945 = vadd.f32 %v935, %v943
    %v946 = vtanh.pop %v945
    %948 = vrot.lane.b32.xlu0 %v946, 64
    %v949 = vpop.permute.xlu0 %948
    %v951 = vmul.f32 %v933, %v949
    %v952 = vpack.c.bf16 %v951, %v951
    %v954 = vsel %vm207, %v952, 0
    %956 = vmatprep.subr.bf16.mxu0 0
    %957 = vmatpush1.bf16.msra.mxu0 0
    %958 = vmatprep.subr.bf16.mxu0 0
    %959 = vmatpush1.bf16.msra.mxu0 0
    %960 = vmatprep.subr.bf16.mxu0 0
    %961 = vmatpush1.bf16.msra.mxu0 0
    %962 = vmatprep.subr.bf16.mxu0 0
    %963 = vmatpush1.bf16.msra.mxu0 0
    %964 = vmatprep.subr.bf16.mxu0 %v405
    %965 = vmatpush1.bf16.msra.mxu0 %v404
    %966 = vmatprep.subr.bf16.mxu0 %v403
    %967 = vmatpush1.bf16.msra.mxu0 %v402
    %968 = vmatprep.subr.bf16.mxu0 %v401
    %969 = vmatpush1.bf16.msra.mxu0 %v400
    %970 = vmatprep.subr.bf16.mxu0 %v399
    %971 = vmatpush1.bf16.msra.mxu0 %v398
    %972 = vmatprep.subr.bf16.mxu0 0
    %973 = vmatpush2.bf16.msra.mxu0 0
    %974 = vmatprep.subr.bf16.mxu0 0
    %975 = vmatpush2.bf16.msra.mxu0 0
    %976 = vmatprep.subr.bf16.mxu0 0
    %977 = vmatpush2.bf16.msra.mxu0 0
    %978 = vmatprep.subr.bf16.mxu0 0
    %979 = vmatpush2.bf16.msra.mxu0 0
    %980 = vmatprep.subr.bf16.mxu0 0
    %981 = vmatpush2.bf16.msra.mxu0 0
    %982 = vmatprep.subr.bf16.mxu0 0
    %983 = vmatpush2.bf16.msra.mxu0 0
    %984 = vmatprep.subr.bf16.mxu0 0
    %985 = vmatpush2.bf16.msra.mxu0 0
    %986 = vmatprep.subr.bf16.mxu0 0
    %987 = vmatpush2.bf16.msra.mxu0 0
    %988 = vmatprep.mubr.bf16.mxu0 0
    %989 = vmatmul.mubr.bf16.gmra.mxu0 %v954
    %v990 = vpop.f32.mrf.mxu0
    %v991 = vadd.f32 0.0, %v990
    %v992 = vpop.f32.mrf.mxu0
    %v993 = vadd.f32 0.0, %v992
    %v994 = vpop.f32.mrf.mxu0
    %v995 = vpop.f32.mrf.mxu0
    %996 = vdwg.mxu0
    %v997 = vadd.f32 %v289, %v991
    %v998 = vadd.f32 %v291, %v993
    %v999 = vxor.u32 %v997, 2147483648
    %v1000 = vxor.u32 %v998, 2147483648
    %v1001 = vmul.f32 %v999, 1.442695
    %v1002 = vpow.pop %v1001
    %v1003 = vmul.f32 %v1000, 1.442695
    %v1004 = vpow.pop %v1003
    %v1005 = vadd.f32 %v1002, 1.0
    %v1006 = vadd.f32 %v1004, 1.0
    %v1007 = vrcp.pop %v1005
    %v1008 = vmul.f32 1.0, %v1007
    %v1009 = vrcp.pop %v1006
    %v1010 = vmul.f32 1.0, %v1009
    %v1011 = vtanh.pop %v998
    %v1012 = vmul.f32 %v1008, %v945
    %1014 = vrot.lane.b32.xlu0 %v1011, 64
    %v1015 = vpop.permute.xlu0 %1014
    %v1017 = vmul.f32 %v1008, %v1015
    %1019 = vrot.lane.b32.xlu0 %v1017, 64
    %v1020 = vpop.permute.xlu0 %1019
    %v1022 = vadd.f32 %v1012, %v1020
    %v1023 = vtanh.pop %v1022
    %1025 = vrot.lane.b32.xlu0 %v1023, 64
    %v1026 = vpop.permute.xlu0 %1025
    %v1028 = vmul.f32 %v1010, %v1026
    %v1029 = vld [vmem:[%s5] sm:$0xf]
    %v1030 = vld [vmem:[%s5 + $0x4] sm:$0xf]
    %v1031 = vld [vmem:[%s5 + $0x8] sm:$0xf]
    %v1032 = vld [vmem:[%s5 + $0xc] sm:$0xf]
    %v1033 = vld [vmem:[%s5 + $0x10] sm:$0xf]
    %v1034 = vld [vmem:[%s5 + $0x14] sm:$0xf]
    %v1035 = vld [vmem:[%s5 + $0x18] sm:$0xf]
    %v1036 = vld [vmem:[%s5 + $0x1c] sm:$0xf]
    %v1037 = vld [vmem:[%s7] sm:$0xf]
    %v1038 = vld [vmem:[%s7 + $0x4] sm:$0xf]
    %v1039 = vld [vmem:[%s7 + $0x8] sm:$0xf]
    %v1040 = vld [vmem:[%s7 + $0xc] sm:$0xf]
    %v1041 = vpack.c.bf16 %v1028, %v1028
    %v1042 = vld [vmem:[%s6] sm:$0x1]
    %v1044 = vlaneseq
    %v1045 = vshrl.u32 %v1044, 7
    %v1046 = vsub.s32 0, %v1045
    %v1047 = vrot.slane %v1042, %v1046
    %v1057 = vunpack.c.l.b16 %v1029
    %v1058 = vunpack.c.l.b16 %v1030
    %v1059 = vunpack.c.l.b16 %v1031
    %v1060 = vunpack.c.l.b16 %v1032
    %v1061 = vunpack.c.l.b16 %v1033
    %v1062 = vunpack.c.l.b16 %v1034
    %v1063 = vunpack.c.l.b16 %v1035
    %v1064 = vunpack.c.l.b16 %v1036
    %v1065 = vpack.c.b16 %v1058, %v1057
    %v1066 = vpack.c.b16 %v1060, %v1059
    %v1067 = vpack.c.b16 %v1062, %v1061
    %v1068 = vpack.c.b16 %v1064, %v1063
    %v1074 = vsel %vm207, %v1041, 0
    %1076 = vmatprep.subr.bf16.mxu0 0
    %1077 = vmatpush1.bf16.msra.mxu0 0
    %1078 = vmatprep.subr.bf16.mxu0 0
    %1079 = vmatpush1.bf16.msra.mxu0 0
    %1080 = vmatprep.subr.bf16.mxu0 0
    %1081 = vmatpush1.bf16.msra.mxu0 0
    %1082 = vmatprep.subr.bf16.mxu0 0
    %1083 = vmatpush1.bf16.msra.mxu0 0
    %1084 = vmatprep.subr.bf16.mxu0 0
    %1085 = vmatpush1.bf16.msra.mxu0 %v1068
    %1086 = vmatprep.subr.bf16.mxu0 0
    %1087 = vmatpush1.bf16.msra.mxu0 %v1067
    %1088 = vmatprep.subr.bf16.mxu0 0
    %1089 = vmatpush1.bf16.msra.mxu0 %v1066
    %1090 = vmatprep.subr.bf16.mxu0 0
    %1091 = vmatpush1.bf16.msra.mxu0 %v1065
    %1092 = vmatprep.subr.bf16.mxu0 0
    %1093 = vmatpush2.bf16.msra.mxu0 0
    %1094 = vmatprep.subr.bf16.mxu0 0
    %1095 = vmatpush2.bf16.msra.mxu0 0
    %1096 = vmatprep.subr.bf16.mxu0 0
    %1097 = vmatpush2.bf16.msra.mxu0 0
    %1098 = vmatprep.subr.bf16.mxu0 0
    %1099 = vmatpush2.bf16.msra.mxu0 0
    %1100 = vmatprep.subr.bf16.mxu0 0
    %1101 = vmatpush2.bf16.msra.mxu0 0
    %1102 = vmatprep.subr.bf16.mxu0 0
    %1103 = vmatpush2.bf16.msra.mxu0 0
    %1104 = vmatprep.subr.bf16.mxu0 0
    %1105 = vmatpush2.bf16.msra.mxu0 0
    %1106 = vmatprep.subr.bf16.mxu0 0
    %1107 = vmatpush2.bf16.msra.mxu0 0
    %1108 = vmatprep.mubr.bf16.mxu0 0
    %1109 = vmatmul.mubr.bf16.gmra.mxu0 %v1074
    %v1110 = vpop.f32.mrf.mxu0
    %v1111 = vadd.f32 %v1047, %v1110
    %v1112 = vpop.f32.mrf.mxu0
    %v1113 = vpop.f32.mrf.mxu0
    %v1114 = vpop.f32.mrf.mxu0
    %1115 = vdwg.mxu0
    %v1116 = vpack.c.bf16 %v1111, %v1111
    %v1117 = vld [vmem:[%s8] sm:$0x1]
    %v1119 = vlaneseq
    %v1120 = vshrl.u32 %v1119, 7
    %v1121 = vsub.s32 0, %v1120
    %v1122 = vrot.slane %v1117, %v1121
    %v1128 = vunpack.c.l.b16 %v1037
    %v1129 = vunpack.c.l.b16 %v1038
    %v1130 = vunpack.c.l.b16 %v1039
    %v1131 = vunpack.c.l.b16 %v1040
    %v1132 = vpack.c.b16 %v1129, %v1128
    %v1133 = vpack.c.b16 %v1131, %v1130
    %vm1136 = vcmask 261120
    %v1138 = vsel %vm1136, %v1116, 0
    %1140 = vmatprep.subr.bf16.mxu0 0
    %1141 = vmatpush1.bf16.msra.mxu0 0
    %1142 = vmatprep.subr.bf16.mxu0 0
    %1143 = vmatpush1.bf16.msra.mxu0 0
    %1144 = vmatprep.subr.bf16.mxu0 0
    %1145 = vmatpush1.bf16.msra.mxu0 0
    %1146 = vmatprep.subr.bf16.mxu0 0
    %1147 = vmatpush1.bf16.msra.mxu0 0
    %1148 = vmatprep.subr.bf16.mxu0 0
    %1149 = vmatpush1.bf16.msra.mxu0 0
    %1150 = vmatprep.subr.bf16.mxu0 0
    %1151 = vmatpush1.bf16.msra.mxu0 0
    %1152 = vmatprep.subr.bf16.mxu0 0
    %1153 = vmatpush1.bf16.msra.mxu0 %v1133
    %1154 = vmatprep.subr.bf16.mxu0 0
    %1155 = vmatpush1.bf16.msra.mxu0 %v1132
    %1156 = vmatprep.subr.bf16.mxu0 0
    %1157 = vmatpush2.bf16.msra.mxu0 0
    %1158 = vmatprep.subr.bf16.mxu0 0
    %1159 = vmatpush2.bf16.msra.mxu0 0
    %1160 = vmatprep.subr.bf16.mxu0 0
    %1161 = vmatpush2.bf16.msra.mxu0 0
    %1162 = vmatprep.subr.bf16.mxu0 0
    %1163 = vmatpush2.bf16.msra.mxu0 0
    %1164 = vmatprep.subr.bf16.mxu0 0
    %1165 = vmatpush2.bf16.msra.mxu0 0
    %1166 = vmatprep.subr.bf16.mxu0 0
    %1167 = vmatpush2.bf16.msra.mxu0 0
    %1168 = vmatprep.subr.bf16.mxu0 0
    %1169 = vmatpush2.bf16.msra.mxu0 0
    %1170 = vmatprep.subr.bf16.mxu0 0
    %1171 = vmatpush2.bf16.msra.mxu0 0
    %1172 = vmatprep.mubr.bf16.mxu0 0
    %1173 = vmatmul.mubr.bf16.gmra.mxu0 %v1138
    %v1174 = vpop.f32.mrf.mxu0
    %v1175 = vadd.f32 %v1122, %v1174
    %v1176 = vpop.f32.mrf.mxu0
    %v1177 = vpop.f32.mrf.mxu0
    %v1178 = vpop.f32.mrf.mxu0
    %1179 = vdwg.mxu0
    %v1180 = vld [vmem:[#allocation4] sm:$0xff]
    %v1181 = vld [vmem:[#allocation4 + $0x8] sm:$0xff]
    %v1182 = vld [vmem:[#allocation4 + $0x10] sm:$0xff]
    %v1183 = vld [vmem:[#allocation4 + $0x18] sm:$0xff]
    %v1184 = vld [vmem:[#allocation4 + $0x20] sm:$0xff]
    %v1185 = vld [vmem:[#allocation4 + $0x28] sm:$0xff]
    %v1186 = vld [vmem:[#allocation4 + $0x30] sm:$0xff]
    %v1187 = vld [vmem:[#allocation4 + $0x38] sm:$0xff]
    %v1188 = vpack.c.bf16 %v1175, %v1175
    %v1197 = vunpack.c.l.b16 %v1180
    %v1198 = vunpack.c.h.b16 %v1180
    %v1199 = vunpack.c.l.b16 %v1181
    %v1200 = vunpack.c.h.b16 %v1181
    %v1201 = vunpack.c.l.b16 %v1182
    %v1202 = vunpack.c.h.b16 %v1182
    %v1203 = vunpack.c.l.b16 %v1183
    %v1204 = vunpack.c.h.b16 %v1183
    %v1205 = vunpack.c.l.b16 %v1184
    %v1206 = vunpack.c.h.b16 %v1184
    %v1207 = vunpack.c.l.b16 %v1185
    %v1208 = vunpack.c.h.b16 %v1185
    %v1209 = vunpack.c.l.b16 %v1186
    %v1210 = vunpack.c.h.b16 %v1186
    %v1211 = vunpack.c.l.b16 %v1187
    %v1212 = vunpack.c.h.b16 %v1187
    %v1213 = vpack.c.b16 %v1199, %v1197
    %v1214 = vpack.c.b16 %v1200, %v1198
    %v1215 = vpack.c.b16 %v1203, %v1201
    %v1216 = vpack.c.b16 %v1204, %v1202
    %v1217 = vpack.c.b16 %v1207, %v1205
    %v1218 = vpack.c.b16 %v1208, %v1206
    %v1219 = vpack.c.b16 %v1211, %v1209
    %v1220 = vpack.c.b16 %v1212, %v1210
    %v1230 = vsel %vm207, %v1188, 0
    %1232 = vmatprep.subr.bf16.mxu0 0
    %1233 = vmatpush1.bf16.msra.mxu0 0
    %1234 = vmatprep.subr.bf16.mxu0 0
    %1235 = vmatpush1.bf16.msra.mxu0 0
    %1236 = vmatprep.subr.bf16.mxu0 0
    %1237 = vmatpush1.bf16.msra.mxu0 0
    %1238 = vmatprep.subr.bf16.mxu0 0
    %1239 = vmatpush1.bf16.msra.mxu0 0
    %1240 = vmatprep.subr.bf16.mxu0 %v1220
    %1241 = vmatpush1.bf16.msra.mxu0 %v1219
    %1242 = vmatprep.subr.bf16.mxu0 %v1218
    %1243 = vmatpush1.bf16.msra.mxu0 %v1217
    %1244 = vmatprep.subr.bf16.mxu0 %v1216
    %1245 = vmatpush1.bf16.msra.mxu0 %v1215
    %1246 = vmatprep.subr.bf16.mxu0 %v1214
    %1247 = vmatpush1.bf16.msra.mxu0 %v1213
    %1248 = vmatprep.subr.bf16.mxu0 0
    %1249 = vmatpush2.bf16.msra.mxu0 0
    %1250 = vmatprep.subr.bf16.mxu0 0
    %1251 = vmatpush2.bf16.msra.mxu0 0
    %1252 = vmatprep.subr.bf16.mxu0 0
    %1253 = vmatpush2.bf16.msra.mxu0 0
    %1254 = vmatprep.subr.bf16.mxu0 0
    %1255 = vmatpush2.bf16.msra.mxu0 0
    %1256 = vmatprep.subr.bf16.mxu0 0
    %1257 = vmatpush2.bf16.msra.mxu0 0
    %1258 = vmatprep.subr.bf16.mxu0 0
    %1259 = vmatpush2.bf16.msra.mxu0 0
    %1260 = vmatprep.subr.bf16.mxu0 0
    %1261 = vmatpush2.bf16.msra.mxu0 0
    %1262 = vmatprep.subr.bf16.mxu0 0
    %1263 = vmatpush2.bf16.msra.mxu0 0
    %1264 = vmatprep.mubr.bf16.mxu0 0
    %1265 = vmatmul.mubr.bf16.gmra.mxu0 %v1230
    %v1266 = vpop.f32.mrf.mxu0
    %v1267 = vadd.f32 0.0, %v1266
    %v1268 = vpop.f32.mrf.mxu0
    %v1269 = vadd.f32 0.0, %v1268
    %v1270 = vpop.f32.mrf.mxu0
    %v1271 = vpop.f32.mrf.mxu0
    %1272 = vdwg.mxu0
    %v1273 = vadd.f32 %v328, %v1267
    %v1274 = vadd.f32 %v330, %v1269
    %v1275 = vxor.u32 %v1273, 2147483648
    %v1276 = vxor.u32 %v1274, 2147483648
    %v1277 = vmul.f32 %v1275, 1.442695
    %v1278 = vpow.pop %v1277
    %v1279 = vmul.f32 %v1276, 1.442695
    %v1280 = vpow.pop %v1279
    %v1281 = vadd.f32 %v1278, 1.0
    %v1282 = vadd.f32 %v1280, 1.0
    %v1283 = vrcp.pop %v1281
    %v1284 = vmul.f32 1.0, %v1283
    %v1285 = vrcp.pop %v1282
    %v1286 = vmul.f32 1.0, %v1285
    %v1287 = vtanh.pop %v1274
    %v1288 = vmul.f32 %v1284, 0.0
    %1290 = vrot.lane.b32.xlu0 %v1287, 64
    %v1291 = vpop.permute.xlu0 %1290
    %v1293 = vmul.f32 %v1284, %v1291
    %1295 = vrot.lane.b32.xlu0 %v1293, 64
    %v1296 = vpop.permute.xlu0 %1295
    %v1298 = vadd.f32 %v1288, %v1296
    %v1299 = vtanh.pop %v1298
    %1301 = vrot.lane.b32.xlu0 %v1299, 64
    %v1302 = vpop.permute.xlu0 %1301
    %v1304 = vmul.f32 %v1286, %v1302
    %v1305 = vpack.c.bf16 %v1304, %v1304
    %v1307 = vsel %vm207, %v1305, 0
    %1309 = vmatprep.subr.bf16.mxu0 0
    %1310 = vmatpush1.bf16.msra.mxu0 0
    %1311 = vmatprep.subr.bf16.mxu0 0
    %1312 = vmatpush1.bf16.msra.mxu0 0
    %1313 = vmatprep.subr.bf16.mxu0 0
    %1314 = vmatpush1.bf16.msra.mxu0 0
    %1315 = vmatprep.subr.bf16.mxu0 0
    %1316 = vmatpush1.bf16.msra.mxu0 0
    %1317 = vmatprep.subr.bf16.mxu0 %v1220
    %1318 = vmatpush1.bf16.msra.mxu0 %v1219
    %1319 = vmatprep.subr.bf16.mxu0 %v1218
    %1320 = vmatpush1.bf16.msra.mxu0 %v1217
    %1321 = vmatprep.subr.bf16.mxu0 %v1216
    %1322 = vmatpush1.bf16.msra.mxu0 %v1215
    %1323 = vmatprep.subr.bf16.mxu0 %v1214
    %1324 = vmatpush1.bf16.msra.mxu0 %v1213
    %1325 = vmatprep.subr.bf16.mxu0 0
    %1326 = vmatpush2.bf16.msra.mxu0 0
    %1327 = vmatprep.subr.bf16.mxu0 0
    %1328 = vmatpush2.bf16.msra.mxu0 0
    %1329 = vmatprep.subr.bf16.mxu0 0
    %1330 = vmatpush2.bf16.msra.mxu0 0
    %1331 = vmatprep.subr.bf16.mxu0 0
    %1332 = vmatpush2.bf16.msra.mxu0 0
    %1333 = vmatprep.subr.bf16.mxu0 0
    %1334 = vmatpush2.bf16.msra.mxu0 0
    %1335 = vmatprep.subr.bf16.mxu0 0
    %1336 = vmatpush2.bf16.msra.mxu0 0
    %1337 = vmatprep.subr.bf16.mxu0 0
    %1338 = vmatpush2.bf16.msra.mxu0 0
    %1339 = vmatprep.subr.bf16.mxu0 0
    %1340 = vmatpush2.bf16.msra.mxu0 0
    %1341 = vmatprep.mubr.bf16.mxu0 0
    %1342 = vmatmul.mubr.bf16.gmra.mxu0 %v1307
    %v1343 = vpop.f32.mrf.mxu0
    %v1344 = vadd.f32 0.0, %v1343
    %v1345 = vpop.f32.mrf.mxu0
    %v1346 = vadd.f32 0.0, %v1345
    %v1347 = vpop.f32.mrf.mxu0
    %v1348 = vpop.f32.mrf.mxu0
    %1349 = vdwg.mxu0
    %v1350 = vadd.f32 %v332, %v1344
    %v1351 = vadd.f32 %v334, %v1346
    %v1352 = vxor.u32 %v1350, 2147483648
    %v1353 = vxor.u32 %v1351, 2147483648
    %v1354 = vmul.f32 %v1352, 1.442695
    %v1355 = vpow.pop %v1354
    %v1356 = vmul.f32 %v1353, 1.442695
    %v1357 = vpow.pop %v1356
    %v1358 = vadd.f32 %v1355, 1.0
    %v1359 = vadd.f32 %v1357, 1.0
    %v1360 = vrcp.pop %v1358
    %v1361 = vmul.f32 1.0, %v1360
    %v1362 = vrcp.pop %v1359
    %v1363 = vmul.f32 1.0, %v1362
    %v1364 = vtanh.pop %v1351
    %v1365 = vmul.f32 %v1361, %v1298
    %1367 = vrot.lane.b32.xlu0 %v1364, 64
    %v1368 = vpop.permute.xlu0 %1367
    %v1370 = vmul.f32 %v1361, %v1368
    %1372 = vrot.lane.b32.xlu0 %v1370, 64
    %v1373 = vpop.permute.xlu0 %1372
    %v1375 = vadd.f32 %v1365, %v1373
    %v1376 = vtanh.pop %v1375
    %1378 = vrot.lane.b32.xlu0 %v1376, 64
    %v1379 = vpop.permute.xlu0 %1378
    %v1381 = vmul.f32 %v1363, %v1379
    %1383 = vrot.lane.b32.xlu0 %v1381, 64
    %v1384 = vpop.permute.xlu0 %1383
    %v1386 = vsel %vm207, %v1304, %v1384
    %1387 = vst [vmem:[%s9] sm:$0xff] %v1386
    %v1388 = vpack.c.bf16 %v1381, %v1381
    %v1390 = vsel %vm207, %v1388, 0
    %1392 = vmatprep.subr.bf16.mxu0 0
    %1393 = vmatpush1.bf16.msra.mxu0 0
    %1394 = vmatprep.subr.bf16.mxu0 0
    %1395 = vmatpush1.bf16.msra.mxu0 0
    %1396 = vmatprep.subr.bf16.mxu0 0
    %1397 = vmatpush1.bf16.msra.mxu0 0
    %1398 = vmatprep.subr.bf16.mxu0 0
    %1399 = vmatpush1.bf16.msra.mxu0 0
    %1400 = vmatprep.subr.bf16.mxu0 %v1220
    %1401 = vmatpush1.bf16.msra.mxu0 %v1219
    %1402 = vmatprep.subr.bf16.mxu0 %v1218
    %1403 = vmatpush1.bf16.msra.mxu0 %v1217
    %1404 = vmatprep.subr.bf16.mxu0 %v1216
    %1405 = vmatpush1.bf16.msra.mxu0 %v1215
    %1406 = vmatprep.subr.bf16.mxu0 %v1214
    %1407 = vmatpush1.bf16.msra.mxu0 %v1213
    %1408 = vmatprep.subr.bf16.mxu0 0
    %1409 = vmatpush2.bf16.msra.mxu0 0
    %1410 = vmatprep.subr.bf16.mxu0 0
    %1411 = vmatpush2.bf16.msra.mxu0 0
    %1412 = vmatprep.subr.bf16.mxu0 0
    %1413 = vmatpush2.bf16.msra.mxu0 0
    %1414 = vmatprep.subr.bf16.mxu0 0
    %1415 = vmatpush2.bf16.msra.mxu0 0
    %1416 = vmatprep.subr.bf16.mxu0 0
    %1417 = vmatpush2.bf16.msra.mxu0 0
    %1418 = vmatprep.subr.bf16.mxu0 0
    %1419 = vmatpush2.bf16.msra.mxu0 0
    %1420 = vmatprep.subr.bf16.mxu0 0
    %1421 = vmatpush2.bf16.msra.mxu0 0
    %1422 = vmatprep.subr.bf16.mxu0 0
    %1423 = vmatpush2.bf16.msra.mxu0 0
    %1424 = vmatprep.mubr.bf16.mxu0 0
    %1425 = vmatmul.mubr.bf16.gmra.mxu0 %v1390
    %v1426 = vpop.f32.mrf.mxu0
    %v1427 = vadd.f32 0.0, %v1426
    %v1428 = vpop.f32.mrf.mxu0
    %v1429 = vadd.f32 0.0, %v1428
    %v1430 = vpop.f32.mrf.mxu0
    %v1431 = vpop.f32.mrf.mxu0
    %1432 = vdwg.mxu0
    %v1433 = vadd.f32 %v338, %v1427
    %v1434 = vadd.f32 %v340, %v1429
    %v1435 = vxor.u32 %v1433, 2147483648
    %v1436 = vxor.u32 %v1434, 2147483648
    %v1437 = vmul.f32 %v1435, 1.442695
    %v1438 = vpow.pop %v1437
    %v1439 = vmul.f32 %v1436, 1.442695
    %v1440 = vpow.pop %v1439
    %v1441 = vadd.f32 %v1438, 1.0
    %v1442 = vadd.f32 %v1440, 1.0
    %v1443 = vrcp.pop %v1441
    %v1444 = vmul.f32 1.0, %v1443
    %v1445 = vrcp.pop %v1442
    %v1446 = vmul.f32 1.0, %v1445
    %v1447 = vtanh.pop %v1434
    %v1448 = vmul.f32 %v1444, %v1375
    %1450 = vrot.lane.b32.xlu0 %v1447, 64
    %v1451 = vpop.permute.xlu0 %1450
    %v1453 = vmul.f32 %v1444, %v1451
    %1455 = vrot.lane.b32.xlu0 %v1453, 64
    %v1456 = vpop.permute.xlu0 %1455
    %v1458 = vadd.f32 %v1448, %v1456
    %v1459 = vtanh.pop %v1458
    %1461 = vrot.lane.b32.xlu0 %v1459, 64
    %v1462 = vpop.permute.xlu0 %1461
    %v1464 = vmul.f32 %v1446, %v1462
    %v1465 = vpack.c.bf16 %v1464, %v1464
    %v1467 = vsel %vm207, %v1465, 0
    %1469 = vmatprep.subr.bf16.mxu0 0
    %1470 = vmatpush1.bf16.msra.mxu0 0
    %1471 = vmatprep.subr.bf16.mxu0 0
    %1472 = vmatpush1.bf16.msra.mxu0 0
    %1473 = vmatprep.subr.bf16.mxu0 0
    %1474 = vmatpush1.bf16.msra.mxu0 0
    %1475 = vmatprep.subr.bf16.mxu0 0
    %1476 = vmatpush1.bf16.msra.mxu0 0
    %1477 = vmatprep.subr.bf16.mxu0 %v1220
    %1478 = vmatpush1.bf16.msra.mxu0 %v1219
    %1479 = vmatprep.subr.bf16.mxu0 %v1218
    %1480 = vmatpush1.bf16.msra.mxu0 %v1217
    %1481 = vmatprep.subr.bf16.mxu0 %v1216
    %1482 = vmatpush1.bf16.msra.mxu0 %v1215
    %1483 = vmatprep.subr.bf16.mxu0 %v1214
    %1484 = vmatpush1.bf16.msra.mxu0 %v1213
    %1485 = vmatprep.subr.bf16.mxu0 0
    %1486 = vmatpush2.bf16.msra.mxu0 0
    %1487 = vmatprep.subr.bf16.mxu0 0
    %1488 = vmatpush2.bf16.msra.mxu0 0
    %1489 = vmatprep.subr.bf16.mxu0 0
    %1490 = vmatpush2.bf16.msra.mxu0 0
    %1491 = vmatprep.subr.bf16.mxu0 0
    %1492 = vmatpush2.bf16.msra.mxu0 0
    %1493 = vmatprep.subr.bf16.mxu0 0
    %1494 = vmatpush2.bf16.msra.mxu0 0
    %1495 = vmatprep.subr.bf16.mxu0 0
    %1496 = vmatpush2.bf16.msra.mxu0 0
    %1497 = vmatprep.subr.bf16.mxu0 0
    %1498 = vmatpush2.bf16.msra.mxu0 0
    %1499 = vmatprep.subr.bf16.mxu0 0
    %1500 = vmatpush2.bf16.msra.mxu0 0
    %1501 = vmatprep.mubr.bf16.mxu0 0
    %1502 = vmatmul.mubr.bf16.gmra.mxu0 %v1467
    %v1503 = vpop.f32.mrf.mxu0
    %v1504 = vadd.f32 0.0, %v1503
    %v1505 = vpop.f32.mrf.mxu0
    %v1506 = vadd.f32 0.0, %v1505
    %v1507 = vpop.f32.mrf.mxu0
    %v1508 = vpop.f32.mrf.mxu0
    %1509 = vdwg.mxu0
    %v1510 = vadd.f32 %v342, %v1504
    %v1511 = vadd.f32 %v344, %v1506
    %v1512 = vxor.u32 %v1510, 2147483648
    %v1513 = vxor.u32 %v1511, 2147483648
    %v1514 = vmul.f32 %v1512, 1.442695
    %v1515 = vpow.pop %v1514
    %v1516 = vmul.f32 %v1513, 1.442695
    %v1517 = vpow.pop %v1516
    %v1518 = vadd.f32 %v1515, 1.0
    %v1519 = vadd.f32 %v1517, 1.0
    %v1520 = vrcp.pop %v1518
    %v1521 = vmul.f32 1.0, %v1520
    %v1522 = vrcp.pop %v1519
    %v1523 = vmul.f32 1.0, %v1522
    %v1524 = vtanh.pop %v1511
    %v1525 = vmul.f32 %v1521, %v1458
    %1527 = vrot.lane.b32.xlu0 %v1524, 64
    %v1528 = vpop.permute.xlu0 %1527
    %v1530 = vmul.f32 %v1521, %v1528
    %1532 = vrot.lane.b32.xlu0 %v1530, 64
    %v1533 = vpop.permute.xlu0 %1532
    %v1535 = vadd.f32 %v1525, %v1533
    %v1536 = vtanh.pop %v1535
    %1538 = vrot.lane.b32.xlu0 %v1536, 64
    %v1539 = vpop.permute.xlu0 %1538
    %v1541 = vmul.f32 %v1523, %v1539
    %1543 = vrot.lane.b32.xlu0 %v1541, 64
    %v1544 = vpop.permute.xlu0 %1543
    %v1546 = vsel %vm207, %v1464, %v1544
    %1547 = vst [vmem:[%s9 + $0x8] sm:$0xff] %v1546
    %v1548 = vpack.c.bf16 %v1541, %v1541
    %v1550 = vsel %vm207, %v1548, 0
    %1552 = vmatprep.subr.bf16.mxu0 0
    %1553 = vmatpush1.bf16.msra.mxu0 0
    %1554 = vmatprep.subr.bf16.mxu0 0
    %1555 = vmatpush1.bf16.msra.mxu0 0
    %1556 = vmatprep.subr.bf16.mxu0 0
    %1557 = vmatpush1.bf16.msra.mxu0 0
    %1558 = vmatprep.subr.bf16.mxu0 0
    %1559 = vmatpush1.bf16.msra.mxu0 0
    %1560 = vmatprep.subr.bf16.mxu0 %v1220
    %1561 = vmatpush1.bf16.msra.mxu0 %v1219
    %1562 = vmatprep.subr.bf16.mxu0 %v1218
    %1563 = vmatpush1.bf16.msra.mxu0 %v1217
    %1564 = vmatprep.subr.bf16.mxu0 %v1216
    %1565 = vmatpush1.bf16.msra.mxu0 %v1215
    %1566 = vmatprep.subr.bf16.mxu0 %v1214
    %1567 = vmatpush1.bf16.msra.mxu0 %v1213
    %1568 = vmatprep.subr.bf16.mxu0 0
    %1569 = vmatpush2.bf16.msra.mxu0 0
    %1570 = vmatprep.subr.bf16.mxu0 0
    %1571 = vmatpush2.bf16.msra.mxu0 0
    %1572 = vmatprep.subr.bf16.mxu0 0
    %1573 = vmatpush2.bf16.msra.mxu0 0
    %1574 = vmatprep.subr.bf16.mxu0 0
    %1575 = vmatpush2.bf16.msra.mxu0 0
    %1576 = vmatprep.subr.bf16.mxu0 0
    %1577 = vmatpush2.bf16.msra.mxu0 0
    %1578 = vmatprep.subr.bf16.mxu0 0
    %1579 = vmatpush2.bf16.msra.mxu0 0
    %1580 = vmatprep.subr.bf16.mxu0 0
    %1581 = vmatpush2.bf16.msra.mxu0 0
    %1582 = vmatprep.subr.bf16.mxu0 0
    %1583 = vmatpush2.bf16.msra.mxu0 0
    %1584 = vmatprep.mubr.bf16.mxu0 0
    %1585 = vmatmul.mubr.bf16.gmra.mxu0 %v1550
    %v1586 = vpop.f32.mrf.mxu0
    %v1587 = vadd.f32 0.0, %v1586
    %v1588 = vpop.f32.mrf.mxu0
    %v1589 = vadd.f32 0.0, %v1588
    %v1590 = vpop.f32.mrf.mxu0
    %v1591 = vpop.f32.mrf.mxu0
    %1592 = vdwg.mxu0
    %v1593 = vadd.f32 %v348, %v1587
    %v1594 = vadd.f32 %v350, %v1589
    %v1595 = vxor.u32 %v1593, 2147483648
    %v1596 = vxor.u32 %v1594, 2147483648
    %v1597 = vmul.f32 %v1595, 1.442695
    %v1598 = vpow.pop %v1597
    %v1599 = vmul.f32 %v1596, 1.442695
    %v1600 = vpow.pop %v1599
    %v1601 = vadd.f32 %v1598, 1.0
    %v1602 = vadd.f32 %v1600, 1.0
    %v1603 = vrcp.pop %v1601
    %v1604 = vmul.f32 1.0, %v1603
    %v1605 = vrcp.pop %v1602
    %v1606 = vmul.f32 1.0, %v1605
    %v1607 = vtanh.pop %v1594
    %v1608 = vmul.f32 %v1604, %v1535
    %1610 = vrot.lane.b32.xlu0 %v1607, 64
    %v1611 = vpop.permute.xlu0 %1610
    %v1613 = vmul.f32 %v1604, %v1611
    %1615 = vrot.lane.b32.xlu0 %v1613, 64
    %v1616 = vpop.permute.xlu0 %1615
    %v1618 = vadd.f32 %v1608, %v1616
    %v1619 = vtanh.pop %v1618
    %1621 = vrot.lane.b32.xlu0 %v1619, 64
    %v1622 = vpop.permute.xlu0 %1621
    %v1624 = vmul.f32 %v1606, %v1622
    %v1625 = vpack.c.bf16 %v1624, %v1624
    %v1627 = vsel %vm207, %v1625, 0
    %1629 = vmatprep.subr.bf16.mxu0 0
    %1630 = vmatpush1.bf16.msra.mxu0 0
    %1631 = vmatprep.subr.bf16.mxu0 0
    %1632 = vmatpush1.bf16.msra.mxu0 0
    %1633 = vmatprep.subr.bf16.mxu0 0
    %1634 = vmatpush1.bf16.msra.mxu0 0
    %1635 = vmatprep.subr.bf16.mxu0 0
    %1636 = vmatpush1.bf16.msra.mxu0 0
    %1637 = vmatprep.subr.bf16.mxu0 %v1220
    %1638 = vmatpush1.bf16.msra.mxu0 %v1219
    %1639 = vmatprep.subr.bf16.mxu0 %v1218
    %1640 = vmatpush1.bf16.msra.mxu0 %v1217
    %1641 = vmatprep.subr.bf16.mxu0 %v1216
    %1642 = vmatpush1.bf16.msra.mxu0 %v1215
    %1643 = vmatprep.subr.bf16.mxu0 %v1214
    %1644 = vmatpush1.bf16.msra.mxu0 %v1213
    %1645 = vmatprep.subr.bf16.mxu0 0
    %1646 = vmatpush2.bf16.msra.mxu0 0
    %1647 = vmatprep.subr.bf16.mxu0 0
    %1648 = vmatpush2.bf16.msra.mxu0 0
    %1649 = vmatprep.subr.bf16.mxu0 0
    %1650 = vmatpush2.bf16.msra.mxu0 0
    %1651 = vmatprep.subr.bf16.mxu0 0
    %1652 = vmatpush2.bf16.msra.mxu0 0
    %1653 = vmatprep.subr.bf16.mxu0 0
    %1654 = vmatpush2.bf16.msra.mxu0 0
    %1655 = vmatprep.subr.bf16.mxu0 0
    %1656 = vmatpush2.bf16.msra.mxu0 0
    %1657 = vmatprep.subr.bf16.mxu0 0
    %1658 = vmatpush2.bf16.msra.mxu0 0
    %1659 = vmatprep.subr.bf16.mxu0 0
    %1660 = vmatpush2.bf16.msra.mxu0 0
    %1661 = vmatprep.mubr.bf16.mxu0 0
    %1662 = vmatmul.mubr.bf16.gmra.mxu0 %v1627
    %v1663 = vpop.f32.mrf.mxu0
    %v1664 = vadd.f32 0.0, %v1663
    %v1665 = vpop.f32.mrf.mxu0
    %v1666 = vadd.f32 0.0, %v1665
    %v1667 = vpop.f32.mrf.mxu0
    %v1668 = vpop.f32.mrf.mxu0
    %1669 = vdwg.mxu0
    %v1670 = vadd.f32 %v352, %v1664
    %v1671 = vadd.f32 %v354, %v1666
    %v1672 = vxor.u32 %v1670, 2147483648
    %v1673 = vxor.u32 %v1671, 2147483648
    %v1674 = vmul.f32 %v1672, 1.442695
    %v1675 = vpow.pop %v1674
    %v1676 = vmul.f32 %v1673, 1.442695
    %v1677 = vpow.pop %v1676
    %v1678 = vadd.f32 %v1675, 1.0
    %v1679 = vadd.f32 %v1677, 1.0
    %v1680 = vrcp.pop %v1678
    %v1681 = vmul.f32 1.0, %v1680
    %v1682 = vrcp.pop %v1679
    %v1683 = vmul.f32 1.0, %v1682
    %v1684 = vtanh.pop %v1671
    %v1685 = vmul.f32 %v1681, %v1618
    %1687 = vrot.lane.b32.xlu0 %v1684, 64
    %v1688 = vpop.permute.xlu0 %1687
    %v1690 = vmul.f32 %v1681, %v1688
    %1692 = vrot.lane.b32.xlu0 %v1690, 64
    %v1693 = vpop.permute.xlu0 %1692
    %v1695 = vadd.f32 %v1685, %v1693
    %v1696 = vtanh.pop %v1695
    %1698 = vrot.lane.b32.xlu0 %v1696, 64
    %v1699 = vpop.permute.xlu0 %1698
    %v1701 = vmul.f32 %v1683, %v1699
    %1703 = vrot.lane.b32.xlu0 %v1701, 64
    %v1704 = vpop.permute.xlu0 %1703
    %v1706 = vsel %vm207, %v1624, %v1704
    %1707 = vst [vmem:[%s9 + $0x10] sm:$0xff] %v1706
    %v1708 = vpack.c.bf16 %v1701, %v1701
    %v1710 = vsel %vm207, %v1708, 0
    %1712 = vmatprep.subr.bf16.mxu0 0
    %1713 = vmatpush1.bf16.msra.mxu0 0
    %1714 = vmatprep.subr.bf16.mxu0 0
    %1715 = vmatpush1.bf16.msra.mxu0 0
    %1716 = vmatprep.subr.bf16.mxu0 0
    %1717 = vmatpush1.bf16.msra.mxu0 0
    %1718 = vmatprep.subr.bf16.mxu0 0
    %1719 = vmatpush1.bf16.msra.mxu0 0
    %1720 = vmatprep.subr.bf16.mxu0 %v1220
    %1721 = vmatpush1.bf16.msra.mxu0 %v1219
    %1722 = vmatprep.subr.bf16.mxu0 %v1218
    %1723 = vmatpush1.bf16.msra.mxu0 %v1217
    %1724 = vmatprep.subr.bf16.mxu0 %v1216
    %1725 = vmatpush1.bf16.msra.mxu0 %v1215
    %1726 = vmatprep.subr.bf16.mxu0 %v1214
    %1727 = vmatpush1.bf16.msra.mxu0 %v1213
    %1728 = vmatprep.subr.bf16.mxu0 0
    %1729 = vmatpush2.bf16.msra.mxu0 0
    %1730 = vmatprep.subr.bf16.mxu0 0
    %1731 = vmatpush2.bf16.msra.mxu0 0
    %1732 = vmatprep.subr.bf16.mxu0 0
    %1733 = vmatpush2.bf16.msra.mxu0 0
    %1734 = vmatprep.subr.bf16.mxu0 0
    %1735 = vmatpush2.bf16.msra.mxu0 0
    %1736 = vmatprep.subr.bf16.mxu0 0
    %1737 = vmatpush2.bf16.msra.mxu0 0
    %1738 = vmatprep.subr.bf16.mxu0 0
    %1739 = vmatpush2.bf16.msra.mxu0 0
    %1740 = vmatprep.subr.bf16.mxu0 0
    %1741 = vmatpush2.bf16.msra.mxu0 0
    %1742 = vmatprep.subr.bf16.mxu0 0
    %1743 = vmatpush2.bf16.msra.mxu0 0
    %1744 = vmatprep.mubr.bf16.mxu0 0
    %1745 = vmatmul.mubr.bf16.gmra.mxu0 %v1710
    %v1746 = vpop.f32.mrf.mxu0
    %v1747 = vadd.f32 0.0, %v1746
    %v1748 = vpop.f32.mrf.mxu0
    %v1749 = vadd.f32 0.0, %v1748
    %v1750 = vpop.f32.mrf.mxu0
    %v1751 = vpop.f32.mrf.mxu0
    %1752 = vdwg.mxu0
    %v1753 = vadd.f32 %v358, %v1747
    %v1754 = vadd.f32 %v360, %v1749
    %v1755 = vxor.u32 %v1753, 2147483648
    %v1756 = vxor.u32 %v1754, 2147483648
    %v1757 = vmul.f32 %v1755, 1.442695
    %v1758 = vpow.pop %v1757
    %v1759 = vmul.f32 %v1756, 1.442695
    %v1760 = vpow.pop %v1759
    %v1761 = vadd.f32 %v1758, 1.0
    %v1762 = vadd.f32 %v1760, 1.0
    %v1763 = vrcp.pop %v1761
    %v1764 = vmul.f32 1.0, %v1763
    %v1765 = vrcp.pop %v1762
    %v1766 = vmul.f32 1.0, %v1765
    %v1767 = vtanh.pop %v1754
    %v1768 = vmul.f32 %v1764, %v1695
    %1770 = vrot.lane.b32.xlu0 %v1767, 64
    %v1771 = vpop.permute.xlu0 %1770
    %v1773 = vmul.f32 %v1764, %v1771
    %1775 = vrot.lane.b32.xlu0 %v1773, 64
    %v1776 = vpop.permute.xlu0 %1775
    %v1778 = vadd.f32 %v1768, %v1776
    %v1779 = vtanh.pop %v1778
    %1781 = vrot.lane.b32.xlu0 %v1779, 64
    %v1782 = vpop.permute.xlu0 %1781
    %v1784 = vmul.f32 %v1766, %v1782
    %v1785 = vpack.c.bf16 %v1784, %v1784
    %v1787 = vsel %vm207, %v1785, 0
    %1789 = vmatprep.subr.bf16.mxu0 0
    %1790 = vmatpush1.bf16.msra.mxu0 0
    %1791 = vmatprep.subr.bf16.mxu0 0
    %1792 = vmatpush1.bf16.msra.mxu0 0
    %1793 = vmatprep.subr.bf16.mxu0 0
    %1794 = vmatpush1.bf16.msra.mxu0 0
    %1795 = vmatprep.subr.bf16.mxu0 0
    %1796 = vmatpush1.bf16.msra.mxu0 0
    %1797 = vmatprep.subr.bf16.mxu0 %v1220
    %1798 = vmatpush1.bf16.msra.mxu0 %v1219
    %1799 = vmatprep.subr.bf16.mxu0 %v1218
    %1800 = vmatpush1.bf16.msra.mxu0 %v1217
    %1801 = vmatprep.subr.bf16.mxu0 %v1216
    %1802 = vmatpush1.bf16.msra.mxu0 %v1215
    %1803 = vmatprep.subr.bf16.mxu0 %v1214
    %1804 = vmatpush1.bf16.msra.mxu0 %v1213
    %1805 = vmatprep.subr.bf16.mxu0 0
    %1806 = vmatpush2.bf16.msra.mxu0 0
    %1807 = vmatprep.subr.bf16.mxu0 0
    %1808 = vmatpush2.bf16.msra.mxu0 0
    %1809 = vmatprep.subr.bf16.mxu0 0
    %1810 = vmatpush2.bf16.msra.mxu0 0
    %1811 = vmatprep.subr.bf16.mxu0 0
    %1812 = vmatpush2.bf16.msra.mxu0 0
    %1813 = vmatprep.subr.bf16.mxu0 0
    %1814 = vmatpush2.bf16.msra.mxu0 0
    %1815 = vmatprep.subr.bf16.mxu0 0
    %1816 = vmatpush2.bf16.msra.mxu0 0
    %1817 = vmatprep.subr.bf16.mxu0 0
    %1818 = vmatpush2.bf16.msra.mxu0 0
    %1819 = vmatprep.subr.bf16.mxu0 0
    %1820 = vmatpush2.bf16.msra.mxu0 0
    %1821 = vmatprep.mubr.bf16.mxu0 0
    %1822 = vmatmul.mubr.bf16.gmra.mxu0 %v1787
    %v1823 = vpop.f32.mrf.mxu0
    %v1824 = vadd.f32 0.0, %v1823
    %v1825 = vpop.f32.mrf.mxu0
    %v1826 = vadd.f32 0.0, %v1825
    %v1827 = vpop.f32.mrf.mxu0
    %v1828 = vpop.f32.mrf.mxu0
    %1829 = vdwg.mxu0
    %v1830 = vadd.f32 %v362, %v1824
    %v1831 = vadd.f32 %v364, %v1826
    %v1832 = vxor.u32 %v1830, 2147483648
    %v1833 = vxor.u32 %v1831, 2147483648
    %v1834 = vmul.f32 %v1832, 1.442695
    %v1835 = vpow.pop %v1834
    %v1836 = vmul.f32 %v1833, 1.442695
    %v1837 = vpow.pop %v1836
    %v1838 = vadd.f32 %v1835, 1.0
    %v1839 = vadd.f32 %v1837, 1.0
    %v1840 = vrcp.pop %v1838
    %v1841 = vmul.f32 1.0, %v1840
    %v1842 = vrcp.pop %v1839
    %v1843 = vmul.f32 1.0, %v1842
    %v1844 = vtanh.pop %v1831
    %v1845 = vmul.f32 %v1841, %v1778
    %1847 = vrot.lane.b32.xlu0 %v1844, 64
    %v1848 = vpop.permute.xlu0 %1847
    %v1850 = vmul.f32 %v1841, %v1848
    %1852 = vrot.lane.b32.xlu0 %v1850, 64
    %v1853 = vpop.permute.xlu0 %1852
    %v1855 = vadd.f32 %v1845, %v1853
    %v1856 = vtanh.pop %v1855
    %1858 = vrot.lane.b32.xlu0 %v1856, 64
    %v1859 = vpop.permute.xlu0 %1858
    %v1861 = vmul.f32 %v1843, %v1859
    %1863 = vrot.lane.b32.xlu0 %v1861, 64
    %v1864 = vpop.permute.xlu0 %1863
    %v1866 = vsel %vm207, %v1784, %v1864
    %1867 = vst [vmem:[%s9 + $0x18] sm:$0xff] %v1866
    // Predicated region
    $region46: #{rnn_autoencoder_forward.1} parent=1 // pred_check
      _
    $region47: #{rnn_autoencoder_forward.1} parent=1 // pred_check_branch
      %1869 = sbr.rel (0) target = $region49
    $region48: #{rnn_autoencoder_forward.1} parent=1 // pred_region
      _
    $region49: #{rnn_autoencoder_forward.1} parent=1 // pred_fallthru
      _
    // Predicated region
    $region50: #{rnn_autoencoder_forward.1} parent=1 // pred_check
      _
    $region51: #{rnn_autoencoder_forward.1} parent=1 // pred_check_branch
      %1871 = sbr.rel (0) target = $region53
    $region52: #{rnn_autoencoder_forward.1} parent=1 // pred_region
      _
    $region53: #{rnn_autoencoder_forward.1} parent=1 // pred_fallthru
      _
    %1872 = vsyncpa [#allocation3], 1
    %1873 = vsyncpa [#allocation5], 1

</llo_original>
